<compile_context>
chip_gen: v6e
topology: v6e:2x2x1
jax: 0.10.0
libtpu: 0.0.40
codegen_flags: <defaults>
</compile_context>

<pallas_src>
import math
import functools

import jax
import jax.numpy as jnp
from jax.experimental import pallas as pl
from jax.experimental.pallas import tpu as pltpu


def _pick_q_tile(T, n_head):
    """Largest query tile (from a descending menu of multiples of 8) that divides T
    and keeps the (H, tq, T) score slab under a VMEM budget.  Fallback: full T."""
    budget = 8 << 20  # rough bytes for f32 scores + exp + bf16 probs
    divisors = [c for c in (512, 384, 256, 128, 64, 32, 16, 8) if T % c == 0]
    for cand in divisors:  # descending
        if n_head * cand * T * 10 <= budget:
            return cand
    if divisors:
        return divisors[-1]
    return T  # odd T: single full-axis block (valid BlockSpec: equals full dim)


def _vmem_limit_bytes(B, T, C, n_head, tq, out_itemsize):
    """Footprint-derived VMEM request, capped below the detected per-core capacity."""
    weights = 2 * (4 * C * C) * 2              # ~4*C^2 bf16 params, double-buffered
    x_blk = 2 * T * C * 2                      # (1, T, C) bf16, double-buffered
    out_blk = 2 * tq * C * out_itemsize
    scratch = 3 * T * C * 2                    # Q / K^T / V bf16 caches
    proj_tmp = n_head * T * C * 2 + 3 * T * C * 4   # broadcast x + f32 projection results
    scores = n_head * tq * T * 10              # f32 s + exp temp + bf16 probs
    need = weights + x_blk + out_blk + scratch + proj_tmp + scores + (4 << 20)
    try:
        cap = pltpu.get_tpu_info().vmem_capacity_bytes
    except Exception:
        cap = 64 << 20                          # v7x-safe fallback capacity
    return int(max(32 << 20, min(need, cap - (8 << 20))))


def _attn_kernel(x_ref, wq_ref, bq_ref, wkT_ref, bkT_ref, wv_ref, bv_ref,
                 wp_ref, bp_ref, o_ref, q_scr, k_scr, v_scr,
                 *, n_head, fuse_proj):
    """Grid = (batch, q_tile).

    At q_tile == 0 the head-batched Q/K/V projections for the whole sequence run
    once (bf16 MXU, f32 accumulation) and are cached in VMEM scratch: Q and V
    head-major (H, T, hs), K pre-transposed (H, hs, T).  Every q_tile then runs
    head-batched attention and the fused head-merge / output projection."""
    _, T, C = x_ref.shape
    hs = C // n_head
    tq = o_ref.shape[1]
    i = pl.program_id(1)

    @pl.when(i == 0)
    def _project_qkv():
        # Head-batched projections write head-major scratch straight from the MXU
        # (no (T,3C) slab, no per-head lane slicing).  Softmax scale is already
        # folded into the Q weights/bias on the host.
        xb = jnp.broadcast_to(x_ref[0], (n_head, T, C))                       # (H,T,C) bf16
        q = jnp.einsum("htc,hcd->htd", xb, wq_ref[...],
                       preferred_element_type=jnp.float32) + bq_ref[...]      # (H,T,hs)
        v = jnp.einsum("htc,hcd->htd", xb, wv_ref[...],
                       preferred_element_type=jnp.float32) + bv_ref[...]      # (H,T,hs)
        kt = jnp.einsum("hdc,htc->hdt", wkT_ref[...], xb,
                        preferred_element_type=jnp.float32) + bkT_ref[...]    # (H,hs,T)
        q_scr[...] = q.astype(jnp.bfloat16)
        v_scr[...] = v.astype(jnp.bfloat16)
        k_scr[...] = kt.astype(jnp.bfloat16)

    q0 = pl.multiple_of(i * tq, tq)
    q = q_scr[:, pl.ds(q0, tq), :]                                  # (H, tq, hs) bf16
    kt = k_scr[...]                                                 # (H, hs, T)  bf16
    v = v_scr[...]                                                  # (H, T,  hs) bf16

    # Scores: NN batched matmul against pre-transposed K (no relayout per tile).
    s = jnp.einsum("hqd,hdk->hqk", q, kt,
                   preferred_element_type=jnp.float32)              # (H, tq, T) f32
    s = s - jnp.max(s, axis=-1, keepdims=True)
    p = jnp.exp(s)                                                  # unnormalized probs (f32)
    l = jnp.sum(p, axis=-1, keepdims=True)                          # (H, tq, 1) f32
    # attn_drop: identity (eval mode).
    y = jnp.einsum("hqk,hkd->hqd", p.astype(jnp.bfloat16), v,
                   preferred_element_type=jnp.float32)              # (H, tq, hs) f32
    # Normalize AFTER the PV matmul: H*tq*hs multiplies instead of H*tq*T.
    y = (y * pl.reciprocal(l, approx=True)).astype(jnp.bfloat16)

    if fuse_proj:
        # Lane-aligned heads: unmasked lane concat + one full-depth (K=C) matmul.
        y2 = jnp.concatenate([y[h] for h in range(n_head)], axis=-1)  # (tq, C) bf16
        out = jnp.dot(y2, wp_ref[...], preferred_element_type=jnp.float32)
    else:
        # Small heads: accumulate per-head matmuls straight into one (tq, C) f32
        # value (no (H, tq, C) intermediate, no post-hoc H-way reduction).
        out = jnp.dot(y[0], wp_ref[0:hs, :], preferred_element_type=jnp.float32)
        for h in range(1, n_head):
            out = out + jnp.dot(y[h], wp_ref[h * hs:(h + 1) * hs, :],
                                preferred_element_type=jnp.float32)
    out = out + bp_ref[...]                                         # (tq, C) f32
    # resid_drop: identity (eval mode).
    o_ref[0] = out.astype(o_ref.dtype)


def causal_self_attention(x, params, n_head):
    B, T, C = x.shape
    assert C % n_head == 0
    hs = C // n_head
    scale = 1.0 / math.sqrt(hs)

    # ---- host-side packing (layout plumbing, not compute) ----
    def head_major(w):  # (C_in, C_out) -> (H, C_in, hs)
        return w.reshape(C, n_head, hs).transpose(1, 0, 2)

    wq = (head_major(params["wq"]) * scale).astype(jnp.bfloat16)     # scale folded into Q
    wv = head_major(params["wv"]).astype(jnp.bfloat16)
    wkT = params["wk"].reshape(C, n_head, hs).transpose(1, 2, 0).astype(jnp.bfloat16)  # (H, hs, C)
    bq = (params["bq"] * scale).reshape(n_head, 1, hs).astype(jnp.float32)
    bv = params["bv"].reshape(n_head, 1, hs).astype(jnp.float32)
    bkT = params["bk"].reshape(n_head, hs, 1).astype(jnp.float32)
    wp = params["wp"].astype(jnp.bfloat16)                           # (C, C)
    bp = params["bp"].astype(jnp.float32)                            # (1, C)

    tq = _pick_q_tile(T, n_head)
    nq = T // tq if T % tq == 0 else 1
    fuse_proj = (hs % 128 == 0)   # lane-aligned heads -> fused full-depth projection
    out_itemsize = jnp.dtype(x.dtype).itemsize

    kernel = functools.partial(_attn_kernel, n_head=n_head, fuse_proj=fuse_proj)

    grid_spec = pltpu.PrefetchScalarGridSpec(
        num_scalar_prefetch=0,
        grid=(B, nq),
        in_specs=[
            pl.BlockSpec((1, T, C), lambda b, i: (b, 0, 0)),          # x (full seq per batch)
            pl.BlockSpec((n_head, C, hs), lambda b, i: (0, 0, 0)),    # Wq head-major (scaled)
            pl.BlockSpec((n_head, 1, hs), lambda b, i: (0, 0, 0)),    # bq (scaled)
            pl.BlockSpec((n_head, hs, C), lambda b, i: (0, 0, 0)),    # Wk^T head-major
            pl.BlockSpec((n_head, hs, 1), lambda b, i: (0, 0, 0)),    # bk (transposed)
            pl.BlockSpec((n_head, C, hs), lambda b, i: (0, 0, 0)),    # Wv head-major
            pl.BlockSpec((n_head, 1, hs), lambda b, i: (0, 0, 0)),    # bv
            pl.BlockSpec((C, C), lambda b, i: (0, 0)),                # Wproj
            pl.BlockSpec((1, C), lambda b, i: (0, 0)),                # bproj
        ],
        out_specs=pl.BlockSpec((1, tq, C), lambda b, i: (b, i, 0)),
        scratch_shapes=[
            pltpu.VMEM((n_head, T, hs), jnp.bfloat16),   # Q cache (head-major, pre-scaled)
            pltpu.VMEM((n_head, hs, T), jnp.bfloat16),   # K^T cache (lane-dense in T)
            pltpu.VMEM((n_head, T, hs), jnp.bfloat16),   # V cache
        ],
    )

    flops = 8 * B * T * C * C + 4 * B * T * T * C
    cost = pl.CostEstimate(
        flops=int(flops),
        transcendentals=int(B * n_head * T * T),
        bytes_accessed=int(B * T * C * 2 + 4 * C * C * 2 + B * T * C * out_itemsize),
    )

    return pl.pallas_call(
        kernel,
        out_shape=jax.ShapeDtypeStruct((B, T, C), x.dtype),
        grid_spec=grid_spec,
        compiler_params=pltpu.CompilerParams(
            # Batch axis parallel (megacore); the q-tile axis stays sequential
            # because K/V/Q are computed at tile 0 and reused from scratch.
            dimension_semantics=("parallel", "arbitrary"),
            vmem_limit_bytes=_vmem_limit_bytes(B, T, C, n_head, tq, out_itemsize),
        ),
        cost_estimate=cost,
    )(x.astype(jnp.bfloat16), wq, bq, wkT, bkT, wv, bv, wp, bp)


def _reference(x, params, n_head):
    """Plain-JAX replica of the PyTorch forward (eval mode).

    Weights and x are rounded to bf16 (then upcast) to mirror the kernel's bf16
    MXU inputs (which accumulate in f32), so the comparison isolates
    kernel-structure errors from the intentional bf16 precision choice."""
    B, T, C = x.shape
    hs = C // n_head
    q8 = lambda a: a.astype(jnp.bfloat16).astype(jnp.float32)

    def lin(a, w, b):
        return a @ q8(w) + b

    xq = q8(x)
    q = lin(xq, params["wq"], params["bq"]).reshape(B, T, n_head, hs).transpose(0, 2, 1, 3)
    k = lin(xq, params["wk"], params["bk"]).reshape(B, T, n_head, hs).transpose(0, 2, 1, 3)
    v = lin(xq, params["wv"], params["bv"]).reshape(B, T, n_head, hs).transpose(0, 2, 1, 3)
    att = (q @ jnp.swapaxes(k, -2, -1)) * (1.0 / math.sqrt(hs))
    att = jax.nn.softmax(att, axis=-1)
    y = (att @ v).transpose(0, 2, 1, 3).reshape(B, T, C)
    return lin(y, params["wp"], params["bp"])


def init_params(key, n_embd):
    """Deterministic synthetic parameters (PyTorch-style (out,in) weights,
    stored transposed as (in,out) so the kernel computes x @ W + b)."""
    keys = jax.random.split(key, 8)
    bound = 1.0 / math.sqrt(n_embd)

    def w(k):  # (out,in) init, return transposed (in,out)
        return jax.random.uniform(k, (n_embd, n_embd), jnp.float32, -bound, bound).T

    def b(k):
        return jax.random.uniform(k, (1, n_embd), jnp.float32, -bound, bound)

    return {
        "wq": w(keys[0]), "bq": b(keys[1]),
        "wk": w(keys[2]), "bk": b(keys[3]),
        "wv": w(keys[4]), "bv": b(keys[5]),
        "wp": w(keys[6]), "bp": b(keys[7]),
    }


if __name__ == "__main__":
    key = jax.random.PRNGKey(0)
    k1, k2 = jax.random.split(key)

    def run_case(B, T, C, n_head, kcase):
        kx, kp = jax.random.split(kcase)
        x = jax.random.normal(kx, (B, T, C), jnp.float32)
        params = init_params(kp, C)
        out = jax.block_until_ready(causal_self_attention(x, params, n_head))
        ref = _reference(x, params, n_head)
        assert out.shape == (B, T, C)
        max_err = float(jnp.max(jnp.abs(out - ref)))
        assert jnp.allclose(out, ref, atol=2e-2, rtol=2e-2), \
            f"mismatch vs reference (max abs err {max_err})"

    # Small config (hs < 128): exercises the per-head accumulation projection path.
    run_case(2, 8, 32, 4, k1)
    # Lane-dense config (hs = 128, multiple q tiles): exercises head-batched
    # projections into resident scratch, pre-transposed K, post-PV softmax
    # normalization and the fused full-depth output projection.
    run_case(2, 1024, 256, 2, k2)

    print("KERNEL_OK")
</pallas_src>

<mosaic_0001>
module attributes {stable_mosaic.version = 11 : i64} {
  func.func @_attn_kernel(%arg0: i32, %arg1: i32, %arg2: memref<1x8x32xbf16, #tpu.memory_space<vmem>>, %arg3: memref<4x32x8xbf16, #tpu.memory_space<vmem>>, %arg4: memref<4x1x8xf32, #tpu.memory_space<vmem>>, %arg5: memref<4x8x32xbf16, #tpu.memory_space<vmem>>, %arg6: memref<4x8x1xf32, #tpu.memory_space<vmem>>, %arg7: memref<4x32x8xbf16, #tpu.memory_space<vmem>>, %arg8: memref<4x1x8xf32, #tpu.memory_space<vmem>>, %arg9: memref<32x32xbf16, #tpu.memory_space<vmem>>, %arg10: memref<1x32xf32, #tpu.memory_space<vmem>>, %arg11: memref<1x8x32xf32, #tpu.memory_space<vmem>>, %arg12: memref<4x8x8xbf16, #tpu.memory_space<vmem>>, %arg13: memref<4x8x8xbf16, #tpu.memory_space<vmem>>, %arg14: memref<4x8x8xbf16, #tpu.memory_space<vmem>>) attributes {dimension_semantics = [#tpu.dimension_semantics<parallel>, #tpu.dimension_semantics<arbitrary>], iteration_bounds = array<i64: 2, 1>, scalar_prefetch = 0 : i64, scratch_operands = 3 : i64, tpu.core_type = #tpu.core_type<tc>, window_params = [{transform_indices = @transform_0, window_bounds = array<i64: 1, 8, 32>}, {pipeline_mode = #tpu.pipeline_mode<synchronous>, transform_indices = @transform_1, window_bounds = array<i64: 4, 32, 8>}, {pipeline_mode = #tpu.pipeline_mode<synchronous>, transform_indices = @transform_2, window_bounds = array<i64: 4, 1, 8>}, {pipeline_mode = #tpu.pipeline_mode<synchronous>, transform_indices = @transform_3, window_bounds = array<i64: 4, 8, 32>}, {pipeline_mode = #tpu.pipeline_mode<synchronous>, transform_indices = @transform_4, window_bounds = array<i64: 4, 8, 1>}, {pipeline_mode = #tpu.pipeline_mode<synchronous>, transform_indices = @transform_5, window_bounds = array<i64: 4, 32, 8>}, {pipeline_mode = #tpu.pipeline_mode<synchronous>, transform_indices = @transform_6, window_bounds = array<i64: 4, 1, 8>}, {pipeline_mode = #tpu.pipeline_mode<synchronous>, transform_indices = @transform_7, window_bounds = array<i64: 32, 32>}, {pipeline_mode = #tpu.pipeline_mode<synchronous>, transform_indices = @transform_8, window_bounds = array<i64: 1, 32>}, {transform_indices = @transform_9, window_bounds = array<i64: 1, 8, 32>}]} {
    %c0_i32 = arith.constant 0 : i32
    %0 = arith.cmpi eq, %arg1, %c0_i32 : i32
    %1 = arith.extui %0 : i1 to i32
    %c0_i32_0 = arith.constant 0 : i32
    %2 = arith.cmpi ne, %1, %c0_i32_0 : i32
    scf.if %2 {
      %c0_25 = arith.constant 0 : index
      %c0_26 = arith.constant 0 : index
      %c0_27 = arith.constant 0 : index
      %48 = vector.load %arg2[%c0_25, %c0_26, %c0_27] : memref<1x8x32xbf16, #tpu.memory_space<vmem>>, vector<1x8x32xbf16>
      %49 = vector.shape_cast %48 : vector<1x8x32xbf16> to vector<8x32xbf16>
      %50 = vector.shape_cast %49 : vector<8x32xbf16> to vector<1x8x32xbf16>
      %51 = vector.broadcast %50 : vector<1x8x32xbf16> to vector<4x8x32xbf16>
      %c0_28 = arith.constant 0 : index
      %c0_29 = arith.constant 0 : index
      %c0_30 = arith.constant 0 : index
      %52 = vector.load %arg3[%c0_28, %c0_29, %c0_30] : memref<4x32x8xbf16, #tpu.memory_space<vmem>>, vector<4x32x8xbf16>
      "tpu.trace_start"() <{level = 10 : i32, message = "htc,hcd->htd"}> : () -> ()
      %cst_31 = arith.constant dense<0.000000e+00> : vector<4x8x8xf32>
      %53 = tpu.matmul %51, %52, %cst_31 {dimension_numbers = #tpu.dot_dimension_numbers<[2], [1], [1], [2], [0, 0, 0, 1, 1, 2], [0], [0]>} : vector<4x8x32xbf16>, vector<4x32x8xbf16>, vector<4x8x8xf32> -> vector<4x8x8xf32>
      "tpu.trace_stop"() : () -> ()
      %c0_32 = arith.constant 0 : index
      %c0_33 = arith.constant 0 : index
      %c0_34 = arith.constant 0 : index
      %54 = vector.load %arg4[%c0_32, %c0_33, %c0_34] : memref<4x1x8xf32, #tpu.memory_space<vmem>>, vector<4x1x8xf32>
      %55 = vector.broadcast %54 : vector<4x1x8xf32> to vector<4x8x8xf32>
      %56 = arith.addf %53, %55 : vector<4x8x8xf32>
      %c0_35 = arith.constant 0 : index
      %c0_36 = arith.constant 0 : index
      %c0_37 = arith.constant 0 : index
      %57 = vector.load %arg7[%c0_35, %c0_36, %c0_37] : memref<4x32x8xbf16, #tpu.memory_space<vmem>>, vector<4x32x8xbf16>
      "tpu.trace_start"() <{level = 10 : i32, message = "htc,hcd->htd"}> : () -> ()
      %cst_38 = arith.constant dense<0.000000e+00> : vector<4x8x8xf32>
      %58 = tpu.matmul %51, %57, %cst_38 {dimension_numbers = #tpu.dot_dimension_numbers<[2], [1], [1], [2], [0, 0, 0, 1, 1, 2], [0], [0]>} : vector<4x8x32xbf16>, vector<4x32x8xbf16>, vector<4x8x8xf32> -> vector<4x8x8xf32>
      "tpu.trace_stop"() : () -> ()
      %c0_39 = arith.constant 0 : index
      %c0_40 = arith.constant 0 : index
      %c0_41 = arith.constant 0 : index
      %59 = vector.load %arg8[%c0_39, %c0_40, %c0_41] : memref<4x1x8xf32, #tpu.memory_space<vmem>>, vector<4x1x8xf32>
      %60 = vector.broadcast %59 : vector<4x1x8xf32> to vector<4x8x8xf32>
      %61 = arith.addf %58, %60 : vector<4x8x8xf32>
      %c0_42 = arith.constant 0 : index
      %c0_43 = arith.constant 0 : index
      %c0_44 = arith.constant 0 : index
      %62 = vector.load %arg5[%c0_42, %c0_43, %c0_44] : memref<4x8x32xbf16, #tpu.memory_space<vmem>>, vector<4x8x32xbf16>
      "tpu.trace_start"() <{level = 10 : i32, message = "hdc,htc->hdt"}> : () -> ()
      %cst_45 = arith.constant dense<0.000000e+00> : vector<4x8x8xf32>
      %63 = tpu.matmul %62, %51, %cst_45 {dimension_numbers = #tpu.dot_dimension_numbers<[2], [2], [1], [1], [0, 0, 0, 1, 1, 1], [0], [0]>} : vector<4x8x32xbf16>, vector<4x8x32xbf16>, vector<4x8x8xf32> -> vector<4x8x8xf32>
      "tpu.trace_stop"() : () -> ()
      %c0_46 = arith.constant 0 : index
      %c0_47 = arith.constant 0 : index
      %c0_48 = arith.constant 0 : index
      %64 = vector.load %arg6[%c0_46, %c0_47, %c0_48] : memref<4x8x1xf32, #tpu.memory_space<vmem>>, vector<4x8x1xf32>
      %65 = vector.broadcast %64 : vector<4x8x1xf32> to vector<4x8x8xf32>
      %66 = arith.addf %63, %65 : vector<4x8x8xf32>
      %67 = arith.truncf %56 : vector<4x8x8xf32> to vector<4x8x8xbf16>
      %c0_49 = arith.constant 0 : index
      %c0_50 = arith.constant 0 : index
      %c0_51 = arith.constant 0 : index
      %68 = vector.load %arg12[%c0_49, %c0_50, %c0_51] : memref<4x8x8xbf16, #tpu.memory_space<vmem>>, vector<4x8x8xbf16>
      tpu.vector_store %arg12[%c0_49, %c0_50, %c0_51], %67 {strides = array<i32>} : memref<4x8x8xbf16, #tpu.memory_space<vmem>>, vector<4x8x8xbf16>,
      %69 = arith.truncf %61 : vector<4x8x8xf32> to vector<4x8x8xbf16>
      %c0_52 = arith.constant 0 : index
      %c0_53 = arith.constant 0 : index
      %c0_54 = arith.constant 0 : index
      %70 = vector.load %arg14[%c0_52, %c0_53, %c0_54] : memref<4x8x8xbf16, #tpu.memory_space<vmem>>, vector<4x8x8xbf16>
      tpu.vector_store %arg14[%c0_52, %c0_53, %c0_54], %69 {strides = array<i32>} : memref<4x8x8xbf16, #tpu.memory_space<vmem>>, vector<4x8x8xbf16>,
      %71 = arith.truncf %66 : vector<4x8x8xf32> to vector<4x8x8xbf16>
      %c0_55 = arith.constant 0 : index
      %c0_56 = arith.constant 0 : index
      %c0_57 = arith.constant 0 : index
      %72 = vector.load %arg13[%c0_55, %c0_56, %c0_57] : memref<4x8x8xbf16, #tpu.memory_space<vmem>>, vector<4x8x8xbf16>
      tpu.vector_store %arg13[%c0_55, %c0_56, %c0_57], %71 {strides = array<i32>} : memref<4x8x8xbf16, #tpu.memory_space<vmem>>, vector<4x8x8xbf16>,
    } else {
    }
    %c8_i32 = arith.constant 8 : i32
    %3 = arith.muli %arg1, %c8_i32 : i32
    %4 = tpu.assume_multiple %3, 8 : i32
    %c0 = arith.constant 0 : index
    %5 = arith.index_cast %4 : i32 to index
    %c0_1 = arith.constant 0 : index
    %6 = vector.load %arg12[%c0, %5, %c0_1] : memref<4x8x8xbf16, #tpu.memory_space<vmem>>, vector<4x8x8xbf16>
    %c0_2 = arith.constant 0 : index
    %c0_3 = arith.constant 0 : index
    %c0_4 = arith.constant 0 : index
    %7 = vector.load %arg13[%c0_2, %c0_3, %c0_4] : memref<4x8x8xbf16, #tpu.memory_space<vmem>>, vector<4x8x8xbf16>
    %c0_5 = arith.constant 0 : index
    %c0_6 = arith.constant 0 : index
    %c0_7 = arith.constant 0 : index
    %8 = vector.load %arg14[%c0_5, %c0_6, %c0_7] : memref<4x8x8xbf16, #tpu.memory_space<vmem>>, vector<4x8x8xbf16>
    "tpu.trace_start"() <{level = 10 : i32, message = "hqd,hdk->hqk"}> : () -> ()
    %cst = arith.constant dense<0.000000e+00> : vector<4x8x8xf32>
    %9 = tpu.matmul %6, %7, %cst {dimension_numbers = #tpu.dot_dimension_numbers<[2], [1], [1], [2], [0, 0, 0, 1, 1, 2], [0], [0]>} : vector<4x8x8xbf16>, vector<4x8x8xbf16>, vector<4x8x8xf32> -> vector<4x8x8xf32>
    "tpu.trace_stop"() : () -> ()
    %cst_8 = arith.constant dense<0xFF800000> : vector<4x8xf32>
    %10 = vector.multi_reduction <maximumf>, %9, %cst_8 [2] : vector<4x8x8xf32> to vector<4x8xf32>
    %11 = vector.shape_cast %10 : vector<4x8xf32> to vector<4x8x1xf32>
    %12 = vector.broadcast %11 : vector<4x8x1xf32> to vector<4x8x8xf32>
    %13 = arith.subf %9, %12 : vector<4x8x8xf32>
    %14 = math.exp %13 : vector<4x8x8xf32>
    %cst_9 = arith.constant dense<0.000000e+00> : vector<4x8xf32>
    %15 = vector.multi_reduction <add>, %14, %cst_9 [2] : vector<4x8x8xf32> to vector<4x8xf32>
    %16 = vector.shape_cast %15 : vector<4x8xf32> to vector<4x8x1xf32>
    %17 = arith.truncf %14 : vector<4x8x8xf32> to vector<4x8x8xbf16>
    "tpu.trace_start"() <{level = 10 : i32, message = "hqk,hkd->hqd"}> : () -> ()
    %cst_10 = arith.constant dense<0.000000e+00> : vector<4x8x8xf32>
    %18 = tpu.matmul %17, %8, %cst_10 {dimension_numbers = #tpu.dot_dimension_numbers<[2], [1], [1], [2], [0, 0, 0, 1, 1, 2], [0], [0]>} : vector<4x8x8xbf16>, vector<4x8x8xbf16>, vector<4x8x8xf32> -> vector<4x8x8xf32>
    "tpu.trace_stop"() : () -> ()
    %19 = tpu.reciprocal %16 {approx = true} : vector<4x8x1xf32> -> vector<4x8x1xf32>
    %20 = vector.broadcast %19 : vector<4x8x1xf32> to vector<4x8x8xf32>
    %21 = arith.mulf %18, %20 : vector<4x8x8xf32>
    %22 = arith.truncf %21 : vector<4x8x8xf32> to vector<4x8x8xbf16>
    %23 = vector.extract_strided_slice %22 {offsets = [0, 0, 0], sizes = [1, 8, 8], strides = [1, 1, 1]} : vector<4x8x8xbf16> to vector<1x8x8xbf16>
    %24 = vector.shape_cast %23 : vector<1x8x8xbf16> to vector<8x8xbf16>
    %c0_11 = arith.constant 0 : index
    %c0_12 = arith.constant 0 : index
    %25 = vector.load %arg9[%c0_11, %c0_12] : memref<32x32xbf16, #tpu.memory_space<vmem>>, vector<8x32xbf16>
    %cst_13 = arith.constant dense<0.000000e+00> : vector<8x32xf32>
    %26 = tpu.matmul %24, %25, %cst_13 {dimension_numbers = #tpu.dot_dimension_numbers<[1], [0], [0], [1], [0, 0, 1, 1], [], []>} : vector<8x8xbf16>, vector<8x32xbf16>, vector<8x32xf32> -> vector<8x32xf32>
    %27 = vector.extract_strided_slice %22 {offsets = [1, 0, 0], sizes = [1, 8, 8], strides = [1, 1, 1]} : vector<4x8x8xbf16> to vector<1x8x8xbf16>
    %28 = vector.shape_cast %27 : vector<1x8x8xbf16> to vector<8x8xbf16>
    %c8 = arith.constant 8 : index
    %c0_14 = arith.constant 0 : index
    %29 = vector.load %arg9[%c8, %c0_14] : memref<32x32xbf16, #tpu.memory_space<vmem>>, vector<8x32xbf16>
    %cst_15 = arith.constant dense<0.000000e+00> : vector<8x32xf32>
    %30 = tpu.matmul %28, %29, %cst_15 {dimension_numbers = #tpu.dot_dimension_numbers<[1], [0], [0], [1], [0, 0, 1, 1], [], []>} : vector<8x8xbf16>, vector<8x32xbf16>, vector<8x32xf32> -> vector<8x32xf32>
    %31 = arith.addf %26, %30 : vector<8x32xf32>
    %32 = vector.extract_strided_slice %22 {offsets = [2, 0, 0], sizes = [1, 8, 8], strides = [1, 1, 1]} : vector<4x8x8xbf16> to vector<1x8x8xbf16>
    %33 = vector.shape_cast %32 : vector<1x8x8xbf16> to vector<8x8xbf16>
    %c16 = arith.constant 16 : index
    %c0_16 = arith.constant 0 : index
    %34 = vector.load %arg9[%c16, %c0_16] : memref<32x32xbf16, #tpu.memory_space<vmem>>, vector<8x32xbf16>
    %cst_17 = arith.constant dense<0.000000e+00> : vector<8x32xf32>
    %35 = tpu.matmul %33, %34, %cst_17 {dimension_numbers = #tpu.dot_dimension_numbers<[1], [0], [0], [1], [0, 0, 1, 1], [], []>} : vector<8x8xbf16>, vector<8x32xbf16>, vector<8x32xf32> -> vector<8x32xf32>
    %36 = arith.addf %31, %35 : vector<8x32xf32>
    %37 = vector.extract_strided_slice %22 {offsets = [3, 0, 0], sizes = [1, 8, 8], strides = [1, 1, 1]} : vector<4x8x8xbf16> to vector<1x8x8xbf16>
    %38 = vector.shape_cast %37 : vector<1x8x8xbf16> to vector<8x8xbf16>
    %c24 = arith.constant 24 : index
    %c0_18 = arith.constant 0 : index
    %39 = vector.load %arg9[%c24, %c0_18] : memref<32x32xbf16, #tpu.memory_space<vmem>>, vector<8x32xbf16>
    %cst_19 = arith.constant dense<0.000000e+00> : vector<8x32xf32>
    %40 = tpu.matmul %38, %39, %cst_19 {dimension_numbers = #tpu.dot_dimension_numbers<[1], [0], [0], [1], [0, 0, 1, 1], [], []>} : vector<8x8xbf16>, vector<8x32xbf16>, vector<8x32xf32> -> vector<8x32xf32>
    %41 = arith.addf %36, %40 : vector<8x32xf32>
    %c0_20 = arith.constant 0 : index
    %c0_21 = arith.constant 0 : index
    %42 = vector.load %arg10[%c0_20, %c0_21] : memref<1x32xf32, #tpu.memory_space<vmem>>, vector<1x32xf32>
    %43 = vector.broadcast %42 : vector<1x32xf32> to vector<8x32xf32>
    %44 = arith.addf %41, %43 : vector<8x32xf32>
    %c0_22 = arith.constant 0 : index
    %c0_23 = arith.constant 0 : index
    %c0_24 = arith.constant 0 : index
    %45 = vector.load %arg11[%c0_22, %c0_23, %c0_24] : memref<1x8x32xf32, #tpu.memory_space<vmem>>, vector<1x8x32xf32>
    %46 = vector.shape_cast %45 : vector<1x8x32xf32> to vector<8x32xf32>
    %47 = vector.shape_cast %44 : vector<8x32xf32> to vector<1x8x32xf32>
    tpu.vector_store %arg11[%c0_22, %c0_23, %c0_24], %47 {strides = array<i32>} : memref<1x8x32xf32, #tpu.memory_space<vmem>>, vector<1x8x32xf32>,
    return
  }
  func.func @transform_0(%arg0: i32, %arg1: i32) -> (i32, i32, i32) {
    %c0_i32 = arith.constant 0 : i32
    %c0_i32_0 = arith.constant 0 : i32
    %c0_i32_1 = arith.constant 0 : i32
    return %arg0, %c0_i32, %c0_i32_0 : i32, i32, i32
  }
  func.func @transform_1(%arg0: i32, %arg1: i32) -> (i32, i32, i32) {
    %c0_i32 = arith.constant 0 : i32
    %c0_i32_0 = arith.constant 0 : i32
    %c0_i32_1 = arith.constant 0 : i32
    %c0_i32_2 = arith.constant 0 : i32
    return %c0_i32, %c0_i32_0, %c0_i32_1 : i32, i32, i32
  }
  func.func @transform_2(%arg0: i32, %arg1: i32) -> (i32, i32, i32) {
    %c0_i32 = arith.constant 0 : i32
    %c0_i32_0 = arith.constant 0 : i32
    %c0_i32_1 = arith.constant 0 : i32
    %c0_i32_2 = arith.constant 0 : i32
    return %c0_i32, %c0_i32_0, %c0_i32_1 : i32, i32, i32
  }
  func.func @transform_3(%arg0: i32, %arg1: i32) -> (i32, i32, i32) {
    %c0_i32 = arith.constant 0 : i32
    %c0_i32_0 = arith.constant 0 : i32
    %c0_i32_1 = arith.constant 0 : i32
    %c0_i32_2 = arith.constant 0 : i32
    return %c0_i32, %c0_i32_0, %c0_i32_1 : i32, i32, i32
  }
  func.func @transform_4(%arg0: i32, %arg1: i32) -> (i32, i32, i32) {
    %c0_i32 = arith.constant 0 : i32
    %c0_i32_0 = arith.constant 0 : i32
    %c0_i32_1 = arith.constant 0 : i32
    %c0_i32_2 = arith.constant 0 : i32
    return %c0_i32, %c0_i32_0, %c0_i32_1 : i32, i32, i32
  }
  func.func @transform_5(%arg0: i32, %arg1: i32) -> (i32, i32, i32) {
    %c0_i32 = arith.constant 0 : i32
    %c0_i32_0 = arith.constant 0 : i32
    %c0_i32_1 = arith.constant 0 : i32
    %c0_i32_2 = arith.constant 0 : i32
    return %c0_i32, %c0_i32_0, %c0_i32_1 : i32, i32, i32
  }
  func.func @transform_6(%arg0: i32, %arg1: i32) -> (i32, i32, i32) {
    %c0_i32 = arith.constant 0 : i32
    %c0_i32_0 = arith.constant 0 : i32
    %c0_i32_1 = arith.constant 0 : i32
    %c0_i32_2 = arith.constant 0 : i32
    return %c0_i32, %c0_i32_0, %c0_i32_1 : i32, i32, i32
  }
  func.func @transform_7(%arg0: i32, %arg1: i32) -> (i32, i32) {
    %c0_i32 = arith.constant 0 : i32
    %c0_i32_0 = arith.constant 0 : i32
    %c0_i32_1 = arith.constant 0 : i32
    return %c0_i32, %c0_i32_0 : i32, i32
  }
  func.func @transform_8(%arg0: i32, %arg1: i32) -> (i32, i32) {
    %c0_i32 = arith.constant 0 : i32
    %c0_i32_0 = arith.constant 0 : i32
    %c0_i32_1 = arith.constant 0 : i32
    return %c0_i32, %c0_i32_0 : i32, i32
  }
  func.func @transform_9(%arg0: i32, %arg1: i32) -> (i32, i32, i32) {
    %c0_i32 = arith.constant 0 : i32
    %c0_i32_0 = arith.constant 0 : i32
    return %arg0, %arg1, %c0_i32 : i32, i32, i32
  }
}

</mosaic_0001>

<llo_original>
// kernel: tpu_custom_call.1
$region0: #{tpu_custom_call.1}
  #allocation0 [shape = 'u32[]', space=smem, size = 0x4, offset = 0x4, fixed_abs, tag = 'smem constant byte address 0x4 - core index']
  #allocation1 [shape = 'u32[144,128]{1,0:T(1,128)}', space=vmem, size = 0x12000, scoped, tag = 'internal scratch']
  #allocation2 [shape = 'bf16[4,8,8]{2,1,0:T(8,128)(2,1)}', space=vmem, size = 0x2000, scoped, tag = 'scratch operand']
  #allocation3 [shape = 'bf16[4,8,8]{2,1,0:T(8,128)(2,1)}', space=vmem, size = 0x2000, scoped, tag = 'scratch operand']
  #allocation4 [shape = 'bf16[4,8,8]{2,1,0:T(8,128)(2,1)}', space=vmem, size = 0x2000, scoped, tag = 'scratch operand']
  %s0 = inlined_call_operand.vmem [shape: bf16[2,8,32], index: 0, kind: input, shape index: {}]
  %s1 = inlined_call_operand.vmem [shape: bf16[4,32,8], index: 1, kind: input, shape index: {}]
  %s2 = inlined_call_operand.vmem [shape: f32[4,1,8], index: 2, kind: input, shape index: {}]
  %s3 = inlined_call_operand.vmem [shape: bf16[4,8,32], index: 3, kind: input, shape index: {}]
  %s4 = inlined_call_operand.vmem [shape: f32[4,8,1], index: 4, kind: input, shape index: {}]
  %s5 = inlined_call_operand.vmem [shape: bf16[4,32,8], index: 5, kind: input, shape index: {}]
  %s6 = inlined_call_operand.vmem [shape: f32[4,1,8], index: 6, kind: input, shape index: {}]
  %s7 = inlined_call_operand.vmem [shape: bf16[32,32], index: 7, kind: input, shape index: {}]
  %s8 = inlined_call_operand.vmem [shape: f32[1,32], index: 8, kind: input, shape index: {}]
  %s9 = inlined_call_operand.hbm [shape: f32[2,8,32], index: 9, kind: output, shape index: {}]
  %s10 = sld [smem:[#allocation0]]
  $region73: #{tpu_custom_call.1} parent=0
    _
  %s12 = ssub.s32 1, %s10
  %s13 = scalar_select 0, %s12, %s10
  $region1: #{tpu_custom_call.1} parent=0
    #allocation5 [shape = 'u8[8192]{0}', space=vmem, size = 0x2000, scoped, tag = 'output window, operand 0']
    #allocation6 [shape = 's32[2]{0}', space=sflag, size = 0x8, scoped, tag = 'scoped memory for tpu_custom_call.1']
    %14 = vsyncpa [#allocation6], 0
    %s15 = scalar_lea.sflag [#allocation6], 1
    %16 = vsyncpa %s15, 0
    loop: start=0, step=1, limit=4
    $region2: #{tpu_custom_call.1} parent=1 // loop_pre_header
      _
    $region3: #{tpu_custom_call.1} parent=1 // loop_header
      %s18 = sphi 0, %s22
      %p19 = scmp.ge.s32.totalorder %s18, 4
      %s25 = sphi 0, %s37
      %s26 = sphi 0, %s33
      %s27 = sphi 0, %s25
      %s28 = sphi 0, %s26
      %s29 = sphi 0, %s27
      %s30 = sphi 0, %s28
      %s40 = sphi 0, %s42
      %s43 = sphi 0, %s40
      %s44 = sphi 0, %s43
      %s60 = sphi 0, %s44
      %s64 = sphi 0, %s64
      %s66 = sphi 0, %s64
      %s67 = sphi 0, %s66
      %s81 = sphi 0, %s67
      %s85 = sphi 0, %s85
      %s87 = sphi 0, %s85
      %s88 = sphi 0, %s87
      %s102 = sphi 0, %s88
      %s106 = sphi 0, %s106
      %s108 = sphi 0, %s106
      %s109 = sphi 0, %s108
      %s123 = sphi 0, %s109
      %s127 = sphi 0, %s127
      %s129 = sphi 0, %s127
      %s130 = sphi 0, %s129
      %s144 = sphi 0, %s130
      %s148 = sphi 0, %s148
      %s150 = sphi 0, %s148
      %s151 = sphi 0, %s150
      %s165 = sphi 0, %s151
      %s169 = sphi 0, %s169
      %s171 = sphi 0, %s169
      %s172 = sphi 0, %s171
      %s186 = sphi 0, %s172
      %s190 = sphi 0, %s190
      %s192 = sphi 0, %s190
      %s193 = sphi 0, %s192
      %s207 = sphi 0, %s193
      %s211 = sphi 0, %s211
      %s213 = sphi 0, %s211
      %s214 = sphi 0, %s213
      %s228 = sphi 0, %s214
      %s236 = sphi 0, %s238
      %s239 = sphi 0, %s236
      %s240 = sphi 0, %s239
      %s256 = sphi 0, %s240
    $region4: #{tpu_custom_call.1} parent=1 // loop_header_branch
      %21 = sbr.rel (%p19) target = $region8
    $region5: #{tpu_custom_call.1} parent=1 // loop_body
      %s23 = ssub.s32 %s18, 1
      %s24 = ssub.s32 %s18, 2
      %s31 = sadd.s32 1, %s26
      %p32 = scmp.ge.s32.totalorder %s31, 1
      %s33 = scalar_select %p32, 0, %s31
      %s34 = sadd.s32 1, %s25
      %s35 = scalar_select %p32, %s34, %s25
      %p36 = scmp.ge.s32.totalorder %s35, 2
      %s37 = scalar_select %p36, 0, %s35
      %s38 = ssub.s32 %s25, %s37
      %p39 = scmp.eq.s32.totalorder %s38, 0
      %s41 = sadd.s32 %s40, 1
      %s42 = scalar_select %p39, %s40, %s41
      %p45 = pneg %p39
      %p46 = scmp.eq.s32.totalorder %s18, 1
      %p47 = por %p45, %p46
      %p48 = scmp.ne.s32.totalorder %s40, %s43
      %p49 = scmp.eq.s32.totalorder %s18, 0
      %p50 = por %p48, %p49
      %p51 = scmp.ne.s32.totalorder %s40, %s43
      %p52 = scmp.eq.s32.totalorder %s23, 1
      %p53 = por %p51, %p52
      %p54 = scmp.ne.s32.totalorder %s43, %s44
      %p55 = scmp.eq.s32.totalorder %s23, 0
      %p56 = por %p54, %p55
      %p57 = scmp.ne.s32.totalorder %s43, %s44
      %p58 = scmp.eq.s32.totalorder %s24, 1
      %p59 = por %p57, %p58
      %p61 = scmp.ne.s32.totalorder %s44, %s60
      %p62 = scmp.eq.s32.totalorder %s24, 0
      %p63 = por %p61, %p62
      %s65 = sadd.s32 %s64, 1
      %p68 = scmp.eq.s32.totalorder %s18, 1
      %p69 = scmp.ne.s32.totalorder %s64, %s66
      %p70 = scmp.eq.s32.totalorder %s18, 0
      %p71 = por %p69, %p70
      %p72 = scmp.ne.s32.totalorder %s64, %s66
      %p73 = scmp.eq.s32.totalorder %s23, 1
      %p74 = por %p72, %p73
      %p75 = scmp.ne.s32.totalorder %s66, %s67
      %p76 = scmp.eq.s32.totalorder %s23, 0
      %p77 = por %p75, %p76
      %p78 = scmp.ne.s32.totalorder %s66, %s67
      %p79 = scmp.eq.s32.totalorder %s24, 1
      %p80 = por %p78, %p79
      %p82 = scmp.ne.s32.totalorder %s67, %s81
      %p83 = scmp.eq.s32.totalorder %s24, 0
      %p84 = por %p82, %p83
      %s86 = sadd.s32 %s85, 1
      %p89 = scmp.eq.s32.totalorder %s18, 1
      %p90 = scmp.ne.s32.totalorder %s85, %s87
      %p91 = scmp.eq.s32.totalorder %s18, 0
      %p92 = por %p90, %p91
      %p93 = scmp.ne.s32.totalorder %s85, %s87
      %p94 = scmp.eq.s32.totalorder %s23, 1
      %p95 = por %p93, %p94
      %p96 = scmp.ne.s32.totalorder %s87, %s88
      %p97 = scmp.eq.s32.totalorder %s23, 0
      %p98 = por %p96, %p97
      %p99 = scmp.ne.s32.totalorder %s87, %s88
      %p100 = scmp.eq.s32.totalorder %s24, 1
      %p101 = por %p99, %p100
      %p103 = scmp.ne.s32.totalorder %s88, %s102
      %p104 = scmp.eq.s32.totalorder %s24, 0
      %p105 = por %p103, %p104
      %s107 = sadd.s32 %s106, 1
      %p110 = scmp.eq.s32.totalorder %s18, 1
      %p111 = scmp.ne.s32.totalorder %s106, %s108
      %p112 = scmp.eq.s32.totalorder %s18, 0
      %p113 = por %p111, %p112
      %p114 = scmp.ne.s32.totalorder %s106, %s108
      %p115 = scmp.eq.s32.totalorder %s23, 1
      %p116 = por %p114, %p115
      %p117 = scmp.ne.s32.totalorder %s108, %s109
      %p118 = scmp.eq.s32.totalorder %s23, 0
      %p119 = por %p117, %p118
      %p120 = scmp.ne.s32.totalorder %s108, %s109
      %p121 = scmp.eq.s32.totalorder %s24, 1
      %p122 = por %p120, %p121
      %p124 = scmp.ne.s32.totalorder %s109, %s123
      %p125 = scmp.eq.s32.totalorder %s24, 0
      %p126 = por %p124, %p125
      %s128 = sadd.s32 %s127, 1
      %p131 = scmp.eq.s32.totalorder %s18, 1
      %p132 = scmp.ne.s32.totalorder %s127, %s129
      %p133 = scmp.eq.s32.totalorder %s18, 0
      %p134 = por %p132, %p133
      %p135 = scmp.ne.s32.totalorder %s127, %s129
      %p136 = scmp.eq.s32.totalorder %s23, 1
      %p137 = por %p135, %p136
      %p138 = scmp.ne.s32.totalorder %s129, %s130
      %p139 = scmp.eq.s32.totalorder %s23, 0
      %p140 = por %p138, %p139
      %p141 = scmp.ne.s32.totalorder %s129, %s130
      %p142 = scmp.eq.s32.totalorder %s24, 1
      %p143 = por %p141, %p142
      %p145 = scmp.ne.s32.totalorder %s130, %s144
      %p146 = scmp.eq.s32.totalorder %s24, 0
      %p147 = por %p145, %p146
      %s149 = sadd.s32 %s148, 1
      %p152 = scmp.eq.s32.totalorder %s18, 1
      %p153 = scmp.ne.s32.totalorder %s148, %s150
      %p154 = scmp.eq.s32.totalorder %s18, 0
      %p155 = por %p153, %p154
      %p156 = scmp.ne.s32.totalorder %s148, %s150
      %p157 = scmp.eq.s32.totalorder %s23, 1
      %p158 = por %p156, %p157
      %p159 = scmp.ne.s32.totalorder %s150, %s151
      %p160 = scmp.eq.s32.totalorder %s23, 0
      %p161 = por %p159, %p160
      %p162 = scmp.ne.s32.totalorder %s150, %s151
      %p163 = scmp.eq.s32.totalorder %s24, 1
      %p164 = por %p162, %p163
      %p166 = scmp.ne.s32.totalorder %s151, %s165
      %p167 = scmp.eq.s32.totalorder %s24, 0
      %p168 = por %p166, %p167
      %s170 = sadd.s32 %s169, 1
      %p173 = scmp.eq.s32.totalorder %s18, 1
      %p174 = scmp.ne.s32.totalorder %s169, %s171
      %p175 = scmp.eq.s32.totalorder %s18, 0
      %p176 = por %p174, %p175
      %p177 = scmp.ne.s32.totalorder %s169, %s171
      %p178 = scmp.eq.s32.totalorder %s23, 1
      %p179 = por %p177, %p178
      %p180 = scmp.ne.s32.totalorder %s171, %s172
      %p181 = scmp.eq.s32.totalorder %s23, 0
      %p182 = por %p180, %p181
      %p183 = scmp.ne.s32.totalorder %s171, %s172
      %p184 = scmp.eq.s32.totalorder %s24, 1
      %p185 = por %p183, %p184
      %p187 = scmp.ne.s32.totalorder %s172, %s186
      %p188 = scmp.eq.s32.totalorder %s24, 0
      %p189 = por %p187, %p188
      %s191 = sadd.s32 %s190, 1
      %p194 = scmp.eq.s32.totalorder %s18, 1
      %p195 = scmp.ne.s32.totalorder %s190, %s192
      %p196 = scmp.eq.s32.totalorder %s18, 0
      %p197 = por %p195, %p196
      %p198 = scmp.ne.s32.totalorder %s190, %s192
      %p199 = scmp.eq.s32.totalorder %s23, 1
      %p200 = por %p198, %p199
      %p201 = scmp.ne.s32.totalorder %s192, %s193
      %p202 = scmp.eq.s32.totalorder %s23, 0
      %p203 = por %p201, %p202
      %p204 = scmp.ne.s32.totalorder %s192, %s193
      %p205 = scmp.eq.s32.totalorder %s24, 1
      %p206 = por %p204, %p205
      %p208 = scmp.ne.s32.totalorder %s193, %s207
      %p209 = scmp.eq.s32.totalorder %s24, 0
      %p210 = por %p208, %p209
      %s212 = sadd.s32 %s211, 1
      %p215 = scmp.eq.s32.totalorder %s18, 1
      %p216 = scmp.ne.s32.totalorder %s211, %s213
      %p217 = scmp.eq.s32.totalorder %s18, 0
      %p218 = por %p216, %p217
      %p219 = scmp.ne.s32.totalorder %s211, %s213
      %p220 = scmp.eq.s32.totalorder %s23, 1
      %p221 = por %p219, %p220
      %p222 = scmp.ne.s32.totalorder %s213, %s214
      %p223 = scmp.eq.s32.totalorder %s23, 0
      %p224 = por %p222, %p223
      %p225 = scmp.ne.s32.totalorder %s213, %s214
      %p226 = scmp.eq.s32.totalorder %s24, 1
      %p227 = por %p225, %p226
      %p229 = scmp.ne.s32.totalorder %s214, %s228
      %p230 = scmp.eq.s32.totalorder %s24, 0
      %p231 = por %p229, %p230
      %s232 = ssub.s32 %s25, %s37
      %s233 = ssub.s32 %s26, %s33
      %s234 = sor.u32 %s232, %s233
      %p235 = scmp.eq.s32.totalorder %s234, 0
      %s237 = sadd.s32 %s236, 1
      %s238 = scalar_select %p235, %s236, %s237
      %p241 = pneg %p235
      %p242 = scmp.eq.s32.totalorder %s18, 1
      %p243 = por %p241, %p242
      %p244 = scmp.ne.s32.totalorder %s236, %s239
      %p245 = scmp.eq.s32.totalorder %s18, 0
      %p246 = por %p244, %p245
      %p247 = scmp.ne.s32.totalorder %s236, %s239
      %p248 = scmp.eq.s32.totalorder %s23, 1
      %p249 = por %p247, %p248
      %p250 = scmp.ne.s32.totalorder %s239, %s240
      %p251 = scmp.eq.s32.totalorder %s23, 0
      %p252 = por %p250, %p251
      %p253 = scmp.ne.s32.totalorder %s239, %s240
      %p254 = scmp.eq.s32.totalorder %s24, 1
      %p255 = por %p253, %p254
      %p257 = scmp.ne.s32.totalorder %s240, %s256
      %p258 = scmp.eq.s32.totalorder %s24, 0
      %p259 = por %p257, %p258
      %p260 = scmp.le.s32.totalorder 1, %s18
      %p261 = scmp.lt.s32.totalorder %s18, 3
      %p262 = pnand %p260, %p261
      %p263 = pneg %p262
      // Predicated region
      $region9: #{tpu_custom_call.1} parent=5 // pred_check
        _
      $region10: #{tpu_custom_call.1} parent=5 // pred_check_branch
        %265 = sbr.rel (%p262) target = $region12
      $region11: #{tpu_custom_call.1} parent=5 // pred_region
        %s266 = ssub.s32 %s18, 1
        // Predicated region
        $region13: #{tpu_custom_call.1} parent=11 // pred_check
          %p267 = pneg %p77
        $region14: #{tpu_custom_call.1} parent=11 // pred_check_branch
          %269 = sbr.rel (%p267) target = $region16
        $region15: #{tpu_custom_call.1} parent=11 // pred_region
          _
        $region16: #{tpu_custom_call.1} parent=11 // pred_fallthru
          _
        // Predicated region
        $region17: #{tpu_custom_call.1} parent=11 // pred_check
          %p270 = pneg %p98
        $region18: #{tpu_custom_call.1} parent=11 // pred_check_branch
          %272 = sbr.rel (%p270) target = $region20
        $region19: #{tpu_custom_call.1} parent=11 // pred_region
          _
        $region20: #{tpu_custom_call.1} parent=11 // pred_fallthru
          _
        // Predicated region
        $region21: #{tpu_custom_call.1} parent=11 // pred_check
          %p273 = pneg %p119
        $region22: #{tpu_custom_call.1} parent=11 // pred_check_branch
          %275 = sbr.rel (%p273) target = $region24
        $region23: #{tpu_custom_call.1} parent=11 // pred_region
          _
        $region24: #{tpu_custom_call.1} parent=11 // pred_fallthru
          _
        // Predicated region
        $region25: #{tpu_custom_call.1} parent=11 // pred_check
          %p276 = pneg %p140
        $region26: #{tpu_custom_call.1} parent=11 // pred_check_branch
          %278 = sbr.rel (%p276) target = $region28
        $region27: #{tpu_custom_call.1} parent=11 // pred_region
          _
        $region28: #{tpu_custom_call.1} parent=11 // pred_fallthru
          _
        // Predicated region
        $region29: #{tpu_custom_call.1} parent=11 // pred_check
          %p279 = pneg %p161
        $region30: #{tpu_custom_call.1} parent=11 // pred_check_branch
          %281 = sbr.rel (%p279) target = $region32
        $region31: #{tpu_custom_call.1} parent=11 // pred_region
          _
        $region32: #{tpu_custom_call.1} parent=11 // pred_fallthru
          _
        // Predicated region
        $region33: #{tpu_custom_call.1} parent=11 // pred_check
          %p282 = pneg %p182
        $region34: #{tpu_custom_call.1} parent=11 // pred_check_branch
          %284 = sbr.rel (%p282) target = $region36
        $region35: #{tpu_custom_call.1} parent=11 // pred_region
          _
        $region36: #{tpu_custom_call.1} parent=11 // pred_fallthru
          _
        // Predicated region
        $region37: #{tpu_custom_call.1} parent=11 // pred_check
          %p285 = pneg %p203
        $region38: #{tpu_custom_call.1} parent=11 // pred_check_branch
          %287 = sbr.rel (%p285) target = $region40
        $region39: #{tpu_custom_call.1} parent=11 // pred_region
          _
        $region40: #{tpu_custom_call.1} parent=11 // pred_fallthru
          _
        // Predicated region
        $region41: #{tpu_custom_call.1} parent=11 // pred_check
          %p288 = pneg %p224
        $region42: #{tpu_custom_call.1} parent=11 // pred_check_branch
          %290 = sbr.rel (%p288) target = $region44
        $region43: #{tpu_custom_call.1} parent=11 // pred_region
          _
        $region44: #{tpu_custom_call.1} parent=11 // pred_fallthru
          _
      $region12: #{tpu_custom_call.1} parent=5 // pred_fallthru
        _
      %p291 = scmp.lt.s32.totalorder %s18, 2
      // Predicated region
      $region45: #{tpu_custom_call.1} parent=5 // pred_check
        %p292 = pneg %p291
      $region46: #{tpu_custom_call.1} parent=5 // pred_check_branch
        %294 = sbr.rel (%p292) target = $region48
      $region47: #{tpu_custom_call.1} parent=5 // pred_region
        // Predicated region
        $region49: #{tpu_custom_call.1} parent=47 // pred_check
          %p295 = pneg %p50
        $region50: #{tpu_custom_call.1} parent=47 // pred_check_branch
          %297 = sbr.rel (%p295) target = $region52
        $region51: #{tpu_custom_call.1} parent=47 // pred_region
          %p298 = scmp.lt.s32.totalorder %s25, 1
          %s299 = scalar_select %p298, %s25, 1
          %s300 = smul.addr %s299, 4
          %s301 = scalar_lea.vmem %s0, %s300
        $region52: #{tpu_custom_call.1} parent=47 // pred_fallthru
          _
      $region48: #{tpu_custom_call.1} parent=5 // pred_fallthru
        _
      %p302 = scmp.le.s32.totalorder 1, %s18
      %p303 = scmp.lt.s32.totalorder %s18, 3
      %p304 = pnand %p302, %p303
      %p305 = pneg %p304
      // Predicated region
      $region53: #{tpu_custom_call.1} parent=5 // pred_check
        _
      $region54: #{tpu_custom_call.1} parent=5 // pred_check_branch
        %307 = sbr.rel (%p304) target = $region56
      $region55: #{tpu_custom_call.1} parent=5 // pred_region
        %s308 = ssub.s32 %s18, 1
        %p309 = scmp.lt.s32.totalorder %s27, 1
        %s310 = scalar_select %p309, %s27, 1
        %s311 = smul.addr %s310, 4
        %s312 = scalar_lea.vmem %s0, %s311
        %p313 = pneg %p56
        %p314 = pneg %p53
        %p315 = pneg %p77
        %p316 = pneg %p74
        %p317 = pneg %p98
        %p318 = pneg %p95
        %p319 = pneg %p119
        %p320 = pneg %p116
        %p321 = pneg %p140
        %p322 = pneg %p137
        %p323 = pneg %p161
        %p324 = pneg %p158
        %p325 = pneg %p182
        %p326 = pneg %p179
        %p327 = pneg %p203
        %p328 = pneg %p200
        %p329 = pneg %p224
        %p330 = pneg %p221
        %p331 = pneg %p252
        %p332 = pneg %p249
        %s333 = sand.u32 %s239, 1
        %s334 = scalar_lea.sflag [#allocation6], %s333
        %s335 = sand.u32 %s239, 1
        %s336 = smul.addr %s335, 8
        %s337 = scalar_lea.vmem [#allocation5], %s336
        %p338 = scmp.lt.s32.totalorder %s27, 1
        %s339 = scalar_select %p338, %s27, 1
        %s340 = smul.addr %s339, 4
        %s341 = scalar_lea.vmem %s0, %s340
        %p343 = scmp.eq.s32.totalorder %s28, 0
        // Predicated region
        $region57: #{tpu_custom_call.1} parent=55 // pred_check
          %p344 = pneg %p343
        $region58: #{tpu_custom_call.1} parent=55 // pred_check_branch
          %346 = sbr.rel (%p344) target = $region60
        $region59: #{tpu_custom_call.1} parent=55 // pred_region
          %v347 = vld [vmem:[%s341] sm:$0xf]
          %v348 = vld [vmem:[%s1] sm:$0xf]
          %v349 = vld [vmem:[%s1 + $0x4] sm:$0xf]
          %v350 = vld [vmem:[%s1 + $0x8] sm:$0xf]
          %v351 = vld [vmem:[%s1 + $0xc] sm:$0xf]
          %v352 = vld [vmem:[%s1 + $0x10] sm:$0xf]
          %v353 = vld [vmem:[%s1 + $0x14] sm:$0xf]
          %v354 = vld [vmem:[%s1 + $0x18] sm:$0xf]
          %v355 = vld [vmem:[%s1 + $0x1c] sm:$0xf]
          %v356 = vld [vmem:[%s1 + $0x20] sm:$0xf]
          %v357 = vld [vmem:[%s1 + $0x24] sm:$0xf]
          %v358 = vld [vmem:[%s1 + $0x28] sm:$0xf]
          %v359 = vld [vmem:[%s1 + $0x2c] sm:$0xf]
          %v360 = vld [vmem:[%s1 + $0x30] sm:$0xf]
          %v361 = vld [vmem:[%s1 + $0x34] sm:$0xf]
          %v362 = vld [vmem:[%s1 + $0x38] sm:$0xf]
          %v363 = vld [vmem:[%s1 + $0x3c] sm:$0xf]
          %v364 = vld [vmem:[%s2] sm:$0x1]
          %v365 = vld [vmem:[%s2 + $0x1] sm:$0x1]
          %v366 = vld [vmem:[%s2 + $0x2] sm:$0x1]
          %v367 = vld [vmem:[%s2 + $0x3] sm:$0x1]
          %v372 = vlaneseq
          %v373 = vshrl.u32 %v372, 7
          %v374 = vsub.s32 0, %v373
          %v375 = vrot.slane %v364, %v374
          %v376 = vlaneseq
          %v377 = vshrl.u32 %v376, 7
          %v378 = vsub.s32 0, %v377
          %v379 = vrot.slane %v365, %v378
          %v380 = vlaneseq
          %v381 = vshrl.u32 %v380, 7
          %v382 = vsub.s32 0, %v381
          %v383 = vrot.slane %v366, %v382
          %v384 = vlaneseq
          %v385 = vshrl.u32 %v384, 7
          %v386 = vsub.s32 0, %v385
          %v387 = vrot.slane %v367, %v386
          %v396 = vunpack.c.l.b16 %v348
          %v397 = vunpack.c.l.b16 %v349
          %v398 = vunpack.c.l.b16 %v350
          %v399 = vunpack.c.l.b16 %v351
          %v400 = vpack.c.b16 %v397, %v396
          %v401 = vpack.c.b16 %v399, %v398
          %vm404 = vcmask 261120
          %v406 = vsel %vm404, %v347, 0
          %408 = vmatprep.subr.bf16.mxu0 0
          %409 = vmatpush1.bf16.msra.mxu0 0
          %410 = vmatprep.subr.bf16.mxu0 0
          %411 = vmatpush1.bf16.msra.mxu0 0
          %412 = vmatprep.subr.bf16.mxu0 0
          %413 = vmatpush1.bf16.msra.mxu0 0
          %414 = vmatprep.subr.bf16.mxu0 0
          %415 = vmatpush1.bf16.msra.mxu0 0
          %416 = vmatprep.subr.bf16.mxu0 0
          %417 = vmatpush1.bf16.msra.mxu0 0
          %418 = vmatprep.subr.bf16.mxu0 0
          %419 = vmatpush1.bf16.msra.mxu0 0
          %420 = vmatprep.subr.bf16.mxu0 0
          %421 = vmatpush1.bf16.msra.mxu0 %v401
          %422 = vmatprep.subr.bf16.mxu0 0
          %423 = vmatpush1.bf16.msra.mxu0 %v400
          %424 = vmatprep.subr.bf16.mxu0 0
          %425 = vmatpush2.bf16.msra.mxu0 0
          %426 = vmatprep.subr.bf16.mxu0 0
          %427 = vmatpush2.bf16.msra.mxu0 0
          %428 = vmatprep.subr.bf16.mxu0 0
          %429 = vmatpush2.bf16.msra.mxu0 0
          %430 = vmatprep.subr.bf16.mxu0 0
          %431 = vmatpush2.bf16.msra.mxu0 0
          %432 = vmatprep.subr.bf16.mxu0 0
          %433 = vmatpush2.bf16.msra.mxu0 0
          %434 = vmatprep.subr.bf16.mxu0 0
          %435 = vmatpush2.bf16.msra.mxu0 0
          %436 = vmatprep.subr.bf16.mxu0 0
          %437 = vmatpush2.bf16.msra.mxu0 0
          %438 = vmatprep.subr.bf16.mxu0 0
          %439 = vmatpush2.bf16.msra.mxu0 0
          %440 = vmatprep.mubr.bf16.mxu0 0
          %441 = vmatmul.mubr.bf16.gmra.mxu0 %v406
          %v442 = vpop.f32.mrf.mxu0
          %v443 = vadd.f32 %v375, %v442
          %v444 = vpop.f32.mrf.mxu0
          %v445 = vpop.f32.mrf.mxu0
          %v446 = vpop.f32.mrf.mxu0
          %447 = vdwg.mxu0
          %v452 = vunpack.c.l.b16 %v352
          %v453 = vunpack.c.l.b16 %v353
          %v454 = vunpack.c.l.b16 %v354
          %v455 = vunpack.c.l.b16 %v355
          %v456 = vpack.c.b16 %v453, %v452
          %v457 = vpack.c.b16 %v455, %v454
          %460 = vmatprep.subr.bf16.mxu0 0
          %461 = vmatpush1.bf16.msra.mxu0 0
          %462 = vmatprep.subr.bf16.mxu0 0
          %463 = vmatpush1.bf16.msra.mxu0 0
          %464 = vmatprep.subr.bf16.mxu0 0
          %465 = vmatpush1.bf16.msra.mxu0 0
          %466 = vmatprep.subr.bf16.mxu0 0
          %467 = vmatpush1.bf16.msra.mxu0 0
          %468 = vmatprep.subr.bf16.mxu0 0
          %469 = vmatpush1.bf16.msra.mxu0 0
          %470 = vmatprep.subr.bf16.mxu0 0
          %471 = vmatpush1.bf16.msra.mxu0 0
          %472 = vmatprep.subr.bf16.mxu0 0
          %473 = vmatpush1.bf16.msra.mxu0 %v457
          %474 = vmatprep.subr.bf16.mxu0 0
          %475 = vmatpush1.bf16.msra.mxu0 %v456
          %476 = vmatprep.subr.bf16.mxu0 0
          %477 = vmatpush2.bf16.msra.mxu0 0
          %478 = vmatprep.subr.bf16.mxu0 0
          %479 = vmatpush2.bf16.msra.mxu0 0
          %480 = vmatprep.subr.bf16.mxu0 0
          %481 = vmatpush2.bf16.msra.mxu0 0
          %482 = vmatprep.subr.bf16.mxu0 0
          %483 = vmatpush2.bf16.msra.mxu0 0
          %484 = vmatprep.subr.bf16.mxu0 0
          %485 = vmatpush2.bf16.msra.mxu0 0
          %486 = vmatprep.subr.bf16.mxu0 0
          %487 = vmatpush2.bf16.msra.mxu0 0
          %488 = vmatprep.subr.bf16.mxu0 0
          %489 = vmatpush2.bf16.msra.mxu0 0
          %490 = vmatprep.subr.bf16.mxu0 0
          %491 = vmatpush2.bf16.msra.mxu0 0
          %492 = vmatprep.mubr.bf16.mxu0 0
          %493 = vmatmul.mubr.bf16.gmra.mxu0 %v406
          %v494 = vpop.f32.mrf.mxu0
          %v495 = vadd.f32 %v379, %v494
          %v496 = vpop.f32.mrf.mxu0
          %v497 = vpop.f32.mrf.mxu0
          %v498 = vpop.f32.mrf.mxu0
          %499 = vdwg.mxu0
          %v504 = vunpack.c.l.b16 %v356
          %v505 = vunpack.c.l.b16 %v357
          %v506 = vunpack.c.l.b16 %v358
          %v507 = vunpack.c.l.b16 %v359
          %v508 = vpack.c.b16 %v505, %v504
          %v509 = vpack.c.b16 %v507, %v506
          %512 = vmatprep.subr.bf16.mxu0 0
          %513 = vmatpush1.bf16.msra.mxu0 0
          %514 = vmatprep.subr.bf16.mxu0 0
          %515 = vmatpush1.bf16.msra.mxu0 0
          %516 = vmatprep.subr.bf16.mxu0 0
          %517 = vmatpush1.bf16.msra.mxu0 0
          %518 = vmatprep.subr.bf16.mxu0 0
          %519 = vmatpush1.bf16.msra.mxu0 0
          %520 = vmatprep.subr.bf16.mxu0 0
          %521 = vmatpush1.bf16.msra.mxu0 0
          %522 = vmatprep.subr.bf16.mxu0 0
          %523 = vmatpush1.bf16.msra.mxu0 0
          %524 = vmatprep.subr.bf16.mxu0 0
          %525 = vmatpush1.bf16.msra.mxu0 %v509
          %526 = vmatprep.subr.bf16.mxu0 0
          %527 = vmatpush1.bf16.msra.mxu0 %v508
          %528 = vmatprep.subr.bf16.mxu0 0
          %529 = vmatpush2.bf16.msra.mxu0 0
          %530 = vmatprep.subr.bf16.mxu0 0
          %531 = vmatpush2.bf16.msra.mxu0 0
          %532 = vmatprep.subr.bf16.mxu0 0
          %533 = vmatpush2.bf16.msra.mxu0 0
          %534 = vmatprep.subr.bf16.mxu0 0
          %535 = vmatpush2.bf16.msra.mxu0 0
          %536 = vmatprep.subr.bf16.mxu0 0
          %537 = vmatpush2.bf16.msra.mxu0 0
          %538 = vmatprep.subr.bf16.mxu0 0
          %539 = vmatpush2.bf16.msra.mxu0 0
          %540 = vmatprep.subr.bf16.mxu0 0
          %541 = vmatpush2.bf16.msra.mxu0 0
          %542 = vmatprep.subr.bf16.mxu0 0
          %543 = vmatpush2.bf16.msra.mxu0 0
          %544 = vmatprep.mubr.bf16.mxu0 0
          %545 = vmatmul.mubr.bf16.gmra.mxu0 %v406
          %v546 = vpop.f32.mrf.mxu0
          %v547 = vadd.f32 %v383, %v546
          %v548 = vpop.f32.mrf.mxu0
          %v549 = vpop.f32.mrf.mxu0
          %v550 = vpop.f32.mrf.mxu0
          %551 = vdwg.mxu0
          %v556 = vunpack.c.l.b16 %v360
          %v557 = vunpack.c.l.b16 %v361
          %v558 = vunpack.c.l.b16 %v362
          %v559 = vunpack.c.l.b16 %v363
          %v560 = vpack.c.b16 %v557, %v556
          %v561 = vpack.c.b16 %v559, %v558
          %564 = vmatprep.subr.bf16.mxu0 0
          %565 = vmatpush1.bf16.msra.mxu0 0
          %566 = vmatprep.subr.bf16.mxu0 0
          %567 = vmatpush1.bf16.msra.mxu0 0
          %568 = vmatprep.subr.bf16.mxu0 0
          %569 = vmatpush1.bf16.msra.mxu0 0
          %570 = vmatprep.subr.bf16.mxu0 0
          %571 = vmatpush1.bf16.msra.mxu0 0
          %572 = vmatprep.subr.bf16.mxu0 0
          %573 = vmatpush1.bf16.msra.mxu0 0
          %574 = vmatprep.subr.bf16.mxu0 0
          %575 = vmatpush1.bf16.msra.mxu0 0
          %576 = vmatprep.subr.bf16.mxu0 0
          %577 = vmatpush1.bf16.msra.mxu0 %v561
          %578 = vmatprep.subr.bf16.mxu0 0
          %579 = vmatpush1.bf16.msra.mxu0 %v560
          %580 = vmatprep.subr.bf16.mxu0 0
          %581 = vmatpush2.bf16.msra.mxu0 0
          %582 = vmatprep.subr.bf16.mxu0 0
          %583 = vmatpush2.bf16.msra.mxu0 0
          %584 = vmatprep.subr.bf16.mxu0 0
          %585 = vmatpush2.bf16.msra.mxu0 0
          %586 = vmatprep.subr.bf16.mxu0 0
          %587 = vmatpush2.bf16.msra.mxu0 0
          %588 = vmatprep.subr.bf16.mxu0 0
          %589 = vmatpush2.bf16.msra.mxu0 0
          %590 = vmatprep.subr.bf16.mxu0 0
          %591 = vmatpush2.bf16.msra.mxu0 0
          %592 = vmatprep.subr.bf16.mxu0 0
          %593 = vmatpush2.bf16.msra.mxu0 0
          %594 = vmatprep.subr.bf16.mxu0 0
          %595 = vmatpush2.bf16.msra.mxu0 0
          %596 = vmatprep.mubr.bf16.mxu0 0
          %597 = vmatmul.mubr.bf16.gmra.mxu0 %v406
          %v598 = vpop.f32.mrf.mxu0
          %v599 = vadd.f32 %v387, %v598
          %v600 = vpop.f32.mrf.mxu0
          %v601 = vpop.f32.mrf.mxu0
          %v602 = vpop.f32.mrf.mxu0
          %603 = vdwg.mxu0
          %v604 = vld [vmem:[%s5] sm:$0xf]
          %v605 = vld [vmem:[%s5 + $0x4] sm:$0xf]
          %v606 = vld [vmem:[%s5 + $0x8] sm:$0xf]
          %v607 = vld [vmem:[%s5 + $0xc] sm:$0xf]
          %v608 = vld [vmem:[%s5 + $0x10] sm:$0xf]
          %v609 = vld [vmem:[%s5 + $0x14] sm:$0xf]
          %v610 = vld [vmem:[%s5 + $0x18] sm:$0xf]
          %v611 = vld [vmem:[%s5 + $0x1c] sm:$0xf]
          %v612 = vld [vmem:[%s5 + $0x20] sm:$0xf]
          %v613 = vld [vmem:[%s5 + $0x24] sm:$0xf]
          %v614 = vld [vmem:[%s5 + $0x28] sm:$0xf]
          %v615 = vld [vmem:[%s5 + $0x2c] sm:$0xf]
          %v616 = vld [vmem:[%s5 + $0x30] sm:$0xf]
          %v617 = vld [vmem:[%s5 + $0x34] sm:$0xf]
          %v618 = vld [vmem:[%s5 + $0x38] sm:$0xf]
          %v619 = vld [vmem:[%s5 + $0x3c] sm:$0xf]
          %v620 = vld [vmem:[%s6] sm:$0x1]
          %v621 = vld [vmem:[%s6 + $0x1] sm:$0x1]
          %v622 = vld [vmem:[%s6 + $0x2] sm:$0x1]
          %v623 = vld [vmem:[%s6 + $0x3] sm:$0x1]
          %v628 = vlaneseq
          %v629 = vshrl.u32 %v628, 7
          %v630 = vsub.s32 0, %v629
          %v631 = vrot.slane %v620, %v630
          %v632 = vlaneseq
          %v633 = vshrl.u32 %v632, 7
          %v634 = vsub.s32 0, %v633
          %v635 = vrot.slane %v621, %v634
          %v636 = vlaneseq
          %v637 = vshrl.u32 %v636, 7
          %v638 = vsub.s32 0, %v637
          %v639 = vrot.slane %v622, %v638
          %v640 = vlaneseq
          %v641 = vshrl.u32 %v640, 7
          %v642 = vsub.s32 0, %v641
          %v643 = vrot.slane %v623, %v642
          %v652 = vunpack.c.l.b16 %v604
          %v653 = vunpack.c.l.b16 %v605
          %v654 = vunpack.c.l.b16 %v606
          %v655 = vunpack.c.l.b16 %v607
          %v656 = vpack.c.b16 %v653, %v652
          %v657 = vpack.c.b16 %v655, %v654
          %660 = vmatprep.subr.bf16.mxu0 0
          %661 = vmatpush1.bf16.msra.mxu0 0
          %662 = vmatprep.subr.bf16.mxu0 0
          %663 = vmatpush1.bf16.msra.mxu0 0
          %664 = vmatprep.subr.bf16.mxu0 0
          %665 = vmatpush1.bf16.msra.mxu0 0
          %666 = vmatprep.subr.bf16.mxu0 0
          %667 = vmatpush1.bf16.msra.mxu0 0
          %668 = vmatprep.subr.bf16.mxu0 0
          %669 = vmatpush1.bf16.msra.mxu0 0
          %670 = vmatprep.subr.bf16.mxu0 0
          %671 = vmatpush1.bf16.msra.mxu0 0
          %672 = vmatprep.subr.bf16.mxu0 0
          %673 = vmatpush1.bf16.msra.mxu0 %v657
          %674 = vmatprep.subr.bf16.mxu0 0
          %675 = vmatpush1.bf16.msra.mxu0 %v656
          %676 = vmatprep.subr.bf16.mxu0 0
          %677 = vmatpush2.bf16.msra.mxu0 0
          %678 = vmatprep.subr.bf16.mxu0 0
          %679 = vmatpush2.bf16.msra.mxu0 0
          %680 = vmatprep.subr.bf16.mxu0 0
          %681 = vmatpush2.bf16.msra.mxu0 0
          %682 = vmatprep.subr.bf16.mxu0 0
          %683 = vmatpush2.bf16.msra.mxu0 0
          %684 = vmatprep.subr.bf16.mxu0 0
          %685 = vmatpush2.bf16.msra.mxu0 0
          %686 = vmatprep.subr.bf16.mxu0 0
          %687 = vmatpush2.bf16.msra.mxu0 0
          %688 = vmatprep.subr.bf16.mxu0 0
          %689 = vmatpush2.bf16.msra.mxu0 0
          %690 = vmatprep.subr.bf16.mxu0 0
          %691 = vmatpush2.bf16.msra.mxu0 0
          %692 = vmatprep.mubr.bf16.mxu0 0
          %693 = vmatmul.mubr.bf16.gmra.mxu0 %v406
          %v694 = vpop.f32.mrf.mxu0
          %v695 = vadd.f32 %v631, %v694
          %v696 = vpop.f32.mrf.mxu0
          %v697 = vpop.f32.mrf.mxu0
          %v698 = vpop.f32.mrf.mxu0
          %699 = vdwg.mxu0
          %v704 = vunpack.c.l.b16 %v608
          %v705 = vunpack.c.l.b16 %v609
          %v706 = vunpack.c.l.b16 %v610
          %v707 = vunpack.c.l.b16 %v611
          %v708 = vpack.c.b16 %v705, %v704
          %v709 = vpack.c.b16 %v707, %v706
          %712 = vmatprep.subr.bf16.mxu0 0
          %713 = vmatpush1.bf16.msra.mxu0 0
          %714 = vmatprep.subr.bf16.mxu0 0
          %715 = vmatpush1.bf16.msra.mxu0 0
          %716 = vmatprep.subr.bf16.mxu0 0
          %717 = vmatpush1.bf16.msra.mxu0 0
          %718 = vmatprep.subr.bf16.mxu0 0
          %719 = vmatpush1.bf16.msra.mxu0 0
          %720 = vmatprep.subr.bf16.mxu0 0
          %721 = vmatpush1.bf16.msra.mxu0 0
          %722 = vmatprep.subr.bf16.mxu0 0
          %723 = vmatpush1.bf16.msra.mxu0 0
          %724 = vmatprep.subr.bf16.mxu0 0
          %725 = vmatpush1.bf16.msra.mxu0 %v709
          %726 = vmatprep.subr.bf16.mxu0 0
          %727 = vmatpush1.bf16.msra.mxu0 %v708
          %728 = vmatprep.subr.bf16.mxu0 0
          %729 = vmatpush2.bf16.msra.mxu0 0
          %730 = vmatprep.subr.bf16.mxu0 0
          %731 = vmatpush2.bf16.msra.mxu0 0
          %732 = vmatprep.subr.bf16.mxu0 0
          %733 = vmatpush2.bf16.msra.mxu0 0
          %734 = vmatprep.subr.bf16.mxu0 0
          %735 = vmatpush2.bf16.msra.mxu0 0
          %736 = vmatprep.subr.bf16.mxu0 0
          %737 = vmatpush2.bf16.msra.mxu0 0
          %738 = vmatprep.subr.bf16.mxu0 0
          %739 = vmatpush2.bf16.msra.mxu0 0
          %740 = vmatprep.subr.bf16.mxu0 0
          %741 = vmatpush2.bf16.msra.mxu0 0
          %742 = vmatprep.subr.bf16.mxu0 0
          %743 = vmatpush2.bf16.msra.mxu0 0
          %744 = vmatprep.mubr.bf16.mxu0 0
          %745 = vmatmul.mubr.bf16.gmra.mxu0 %v406
          %v746 = vpop.f32.mrf.mxu0
          %v747 = vadd.f32 %v635, %v746
          %v748 = vpop.f32.mrf.mxu0
          %v749 = vpop.f32.mrf.mxu0
          %v750 = vpop.f32.mrf.mxu0
          %751 = vdwg.mxu0
          %v756 = vunpack.c.l.b16 %v612
          %v757 = vunpack.c.l.b16 %v613
          %v758 = vunpack.c.l.b16 %v614
          %v759 = vunpack.c.l.b16 %v615
          %v760 = vpack.c.b16 %v757, %v756
          %v761 = vpack.c.b16 %v759, %v758
          %764 = vmatprep.subr.bf16.mxu0 0
          %765 = vmatpush1.bf16.msra.mxu0 0
          %766 = vmatprep.subr.bf16.mxu0 0
          %767 = vmatpush1.bf16.msra.mxu0 0
          %768 = vmatprep.subr.bf16.mxu0 0
          %769 = vmatpush1.bf16.msra.mxu0 0
          %770 = vmatprep.subr.bf16.mxu0 0
          %771 = vmatpush1.bf16.msra.mxu0 0
          %772 = vmatprep.subr.bf16.mxu0 0
          %773 = vmatpush1.bf16.msra.mxu0 0
          %774 = vmatprep.subr.bf16.mxu0 0
          %775 = vmatpush1.bf16.msra.mxu0 0
          %776 = vmatprep.subr.bf16.mxu0 0
          %777 = vmatpush1.bf16.msra.mxu0 %v761
          %778 = vmatprep.subr.bf16.mxu0 0
          %779 = vmatpush1.bf16.msra.mxu0 %v760
          %780 = vmatprep.subr.bf16.mxu0 0
          %781 = vmatpush2.bf16.msra.mxu0 0
          %782 = vmatprep.subr.bf16.mxu0 0
          %783 = vmatpush2.bf16.msra.mxu0 0
          %784 = vmatprep.subr.bf16.mxu0 0
          %785 = vmatpush2.bf16.msra.mxu0 0
          %786 = vmatprep.subr.bf16.mxu0 0
          %787 = vmatpush2.bf16.msra.mxu0 0
          %788 = vmatprep.subr.bf16.mxu0 0
          %789 = vmatpush2.bf16.msra.mxu0 0
          %790 = vmatprep.subr.bf16.mxu0 0
          %791 = vmatpush2.bf16.msra.mxu0 0
          %792 = vmatprep.subr.bf16.mxu0 0
          %793 = vmatpush2.bf16.msra.mxu0 0
          %794 = vmatprep.subr.bf16.mxu0 0
          %795 = vmatpush2.bf16.msra.mxu0 0
          %796 = vmatprep.mubr.bf16.mxu0 0
          %797 = vmatmul.mubr.bf16.gmra.mxu0 %v406
          %v798 = vpop.f32.mrf.mxu0
          %v799 = vadd.f32 %v639, %v798
          %v800 = vpop.f32.mrf.mxu0
          %v801 = vpop.f32.mrf.mxu0
          %v802 = vpop.f32.mrf.mxu0
          %803 = vdwg.mxu0
          %v808 = vunpack.c.l.b16 %v616
          %v809 = vunpack.c.l.b16 %v617
          %v810 = vunpack.c.l.b16 %v618
          %v811 = vunpack.c.l.b16 %v619
          %v812 = vpack.c.b16 %v809, %v808
          %v813 = vpack.c.b16 %v811, %v810
          %816 = vmatprep.subr.bf16.mxu0 0
          %817 = vmatpush1.bf16.msra.mxu0 0
          %818 = vmatprep.subr.bf16.mxu0 0
          %819 = vmatpush1.bf16.msra.mxu0 0
          %820 = vmatprep.subr.bf16.mxu0 0
          %821 = vmatpush1.bf16.msra.mxu0 0
          %822 = vmatprep.subr.bf16.mxu0 0
          %823 = vmatpush1.bf16.msra.mxu0 0
          %824 = vmatprep.subr.bf16.mxu0 0
          %825 = vmatpush1.bf16.msra.mxu0 0
          %826 = vmatprep.subr.bf16.mxu0 0
          %827 = vmatpush1.bf16.msra.mxu0 0
          %828 = vmatprep.subr.bf16.mxu0 0
          %829 = vmatpush1.bf16.msra.mxu0 %v813
          %830 = vmatprep.subr.bf16.mxu0 0
          %831 = vmatpush1.bf16.msra.mxu0 %v812
          %832 = vmatprep.subr.bf16.mxu0 0
          %833 = vmatpush2.bf16.msra.mxu0 0
          %834 = vmatprep.subr.bf16.mxu0 0
          %835 = vmatpush2.bf16.msra.mxu0 0
          %836 = vmatprep.subr.bf16.mxu0 0
          %837 = vmatpush2.bf16.msra.mxu0 0
          %838 = vmatprep.subr.bf16.mxu0 0
          %839 = vmatpush2.bf16.msra.mxu0 0
          %840 = vmatprep.subr.bf16.mxu0 0
          %841 = vmatpush2.bf16.msra.mxu0 0
          %842 = vmatprep.subr.bf16.mxu0 0
          %843 = vmatpush2.bf16.msra.mxu0 0
          %844 = vmatprep.subr.bf16.mxu0 0
          %845 = vmatpush2.bf16.msra.mxu0 0
          %846 = vmatprep.subr.bf16.mxu0 0
          %847 = vmatpush2.bf16.msra.mxu0 0
          %848 = vmatprep.mubr.bf16.mxu0 0
          %849 = vmatmul.mubr.bf16.gmra.mxu0 %v406
          %v850 = vpop.f32.mrf.mxu0
          %v851 = vadd.f32 %v643, %v850
          %v852 = vpop.f32.mrf.mxu0
          %v853 = vpop.f32.mrf.mxu0
          %v854 = vpop.f32.mrf.mxu0
          %855 = vdwg.mxu0
          %v856 = vld [vmem:[%s3] sm:$0xf]
          %v857 = vld [vmem:[%s3 + $0x4] sm:$0xf]
          %v858 = vld [vmem:[%s3 + $0x8] sm:$0xf]
          %v859 = vld [vmem:[%s3 + $0xc] sm:$0xf]
          %v860 = vld [vmem:[%s4] sm:$0xff]
          %v861 = vld [vmem:[%s4 + $0x8] sm:$0xff]
          %v862 = vld [vmem:[%s4 + $0x10] sm:$0xff]
          %v863 = vld [vmem:[%s4 + $0x18] sm:$0xff]
          %865 = vset.pattern.permute.xlu0 0
          %866 = vperm.xlu0 %865, %v860
          %v867 = vpop.permute.xlu0 %866
          %870 = vset.pattern.permute.xlu0 0
          %871 = vperm.xlu0 %870, %v861
          %v872 = vpop.permute.xlu0 %871
          %875 = vset.pattern.permute.xlu0 0
          %876 = vperm.xlu0 %875, %v862
          %v877 = vpop.permute.xlu0 %876
          %880 = vset.pattern.permute.xlu0 0
          %881 = vperm.xlu0 %880, %v863
          %v882 = vpop.permute.xlu0 %881
          %v885 = vsel %vm404, %v856, 0
          %887 = vmatprep.subr.bf16.mxu0 0
          %888 = vmatpush1.bf16.xpose.msra.mxu0 0
          %889 = vmatprep.subr.bf16.mxu0 0
          %890 = vmatpush1.bf16.xpose.msra.mxu0 0
          %891 = vmatprep.subr.bf16.mxu0 0
          %892 = vmatpush1.bf16.xpose.msra.mxu0 0
          %893 = vmatprep.subr.bf16.mxu0 0
          %894 = vmatpush1.bf16.xpose.msra.mxu0 0
          %895 = vmatprep.subr.bf16.mxu0 0
          %896 = vmatpush1.bf16.xpose.msra.mxu0 0
          %897 = vmatprep.subr.bf16.mxu0 0
          %898 = vmatpush1.bf16.xpose.msra.mxu0 0
          %899 = vmatprep.subr.bf16.mxu0 0
          %900 = vmatpush1.bf16.xpose.msra.mxu0 0
          %901 = vmatprep.subr.bf16.mxu0 0
          %902 = vmatpush1.bf16.xpose.msra.mxu0 %v406
          %903 = vmatprep.subr.bf16.mxu0 0
          %904 = vmatpush2.bf16.xpose.msra.mxu0 0
          %905 = vmatprep.subr.bf16.mxu0 0
          %906 = vmatpush2.bf16.xpose.msra.mxu0 0
          %907 = vmatprep.subr.bf16.mxu0 0
          %908 = vmatpush2.bf16.xpose.msra.mxu0 0
          %909 = vmatprep.subr.bf16.mxu0 0
          %910 = vmatpush2.bf16.xpose.msra.mxu0 0
          %911 = vmatprep.subr.bf16.mxu0 0
          %912 = vmatpush2.bf16.xpose.msra.mxu0 0
          %913 = vmatprep.subr.bf16.mxu0 0
          %914 = vmatpush2.bf16.xpose.msra.mxu0 0
          %915 = vmatprep.subr.bf16.mxu0 0
          %916 = vmatpush2.bf16.xpose.msra.mxu0 0
          %917 = vmatprep.subr.bf16.mxu0 0
          %918 = vmatpush2.bf16.xpose.msra.mxu0 0
          %919 = vmatprep.mubr.bf16.mxu0 0
          %920 = vmatmul.mubr.bf16.gmra.mxu0 %v885
          %v921 = vpop.f32.mrf.mxu0
          %v922 = vadd.f32 %v867, %v921
          %v923 = vpop.f32.mrf.mxu0
          %v924 = vpop.f32.mrf.mxu0
          %v925 = vpop.f32.mrf.mxu0
          %926 = vdwg.mxu0
          %v928 = vsel %vm404, %v857, 0
          %930 = vmatprep.subr.bf16.mxu0 0
          %931 = vmatpush1.bf16.xpose.msra.mxu0 0
          %932 = vmatprep.subr.bf16.mxu0 0
          %933 = vmatpush1.bf16.xpose.msra.mxu0 0
          %934 = vmatprep.subr.bf16.mxu0 0
          %935 = vmatpush1.bf16.xpose.msra.mxu0 0
          %936 = vmatprep.subr.bf16.mxu0 0
          %937 = vmatpush1.bf16.xpose.msra.mxu0 0
          %938 = vmatprep.subr.bf16.mxu0 0
          %939 = vmatpush1.bf16.xpose.msra.mxu0 0
          %940 = vmatprep.subr.bf16.mxu0 0
          %941 = vmatpush1.bf16.xpose.msra.mxu0 0
          %942 = vmatprep.subr.bf16.mxu0 0
          %943 = vmatpush1.bf16.xpose.msra.mxu0 0
          %944 = vmatprep.subr.bf16.mxu0 0
          %945 = vmatpush1.bf16.xpose.msra.mxu0 %v406
          %946 = vmatprep.subr.bf16.mxu0 0
          %947 = vmatpush2.bf16.xpose.msra.mxu0 0
          %948 = vmatprep.subr.bf16.mxu0 0
          %949 = vmatpush2.bf16.xpose.msra.mxu0 0
          %950 = vmatprep.subr.bf16.mxu0 0
          %951 = vmatpush2.bf16.xpose.msra.mxu0 0
          %952 = vmatprep.subr.bf16.mxu0 0
          %953 = vmatpush2.bf16.xpose.msra.mxu0 0
          %954 = vmatprep.subr.bf16.mxu0 0
          %955 = vmatpush2.bf16.xpose.msra.mxu0 0
          %956 = vmatprep.subr.bf16.mxu0 0
          %957 = vmatpush2.bf16.xpose.msra.mxu0 0
          %958 = vmatprep.subr.bf16.mxu0 0
          %959 = vmatpush2.bf16.xpose.msra.mxu0 0
          %960 = vmatprep.subr.bf16.mxu0 0
          %961 = vmatpush2.bf16.xpose.msra.mxu0 0
          %962 = vmatprep.mubr.bf16.mxu0 0
          %963 = vmatmul.mubr.bf16.gmra.mxu0 %v928
          %v964 = vpop.f32.mrf.mxu0
          %v965 = vadd.f32 %v872, %v964
          %v966 = vpop.f32.mrf.mxu0
          %v967 = vpop.f32.mrf.mxu0
          %v968 = vpop.f32.mrf.mxu0
          %969 = vdwg.mxu0
          %v971 = vsel %vm404, %v858, 0
          %973 = vmatprep.subr.bf16.mxu0 0
          %974 = vmatpush1.bf16.xpose.msra.mxu0 0
          %975 = vmatprep.subr.bf16.mxu0 0
          %976 = vmatpush1.bf16.xpose.msra.mxu0 0
          %977 = vmatprep.subr.bf16.mxu0 0
          %978 = vmatpush1.bf16.xpose.msra.mxu0 0
          %979 = vmatprep.subr.bf16.mxu0 0
          %980 = vmatpush1.bf16.xpose.msra.mxu0 0
          %981 = vmatprep.subr.bf16.mxu0 0
          %982 = vmatpush1.bf16.xpose.msra.mxu0 0
          %983 = vmatprep.subr.bf16.mxu0 0
          %984 = vmatpush1.bf16.xpose.msra.mxu0 0
          %985 = vmatprep.subr.bf16.mxu0 0
          %986 = vmatpush1.bf16.xpose.msra.mxu0 0
          %987 = vmatprep.subr.bf16.mxu0 0
          %988 = vmatpush1.bf16.xpose.msra.mxu0 %v406
          %989 = vmatprep.subr.bf16.mxu0 0
          %990 = vmatpush2.bf16.xpose.msra.mxu0 0
          %991 = vmatprep.subr.bf16.mxu0 0
          %992 = vmatpush2.bf16.xpose.msra.mxu0 0
          %993 = vmatprep.subr.bf16.mxu0 0
          %994 = vmatpush2.bf16.xpose.msra.mxu0 0
          %995 = vmatprep.subr.bf16.mxu0 0
          %996 = vmatpush2.bf16.xpose.msra.mxu0 0
          %997 = vmatprep.subr.bf16.mxu0 0
          %998 = vmatpush2.bf16.xpose.msra.mxu0 0
          %999 = vmatprep.subr.bf16.mxu0 0
          %1000 = vmatpush2.bf16.xpose.msra.mxu0 0
          %1001 = vmatprep.subr.bf16.mxu0 0
          %1002 = vmatpush2.bf16.xpose.msra.mxu0 0
          %1003 = vmatprep.subr.bf16.mxu0 0
          %1004 = vmatpush2.bf16.xpose.msra.mxu0 0
          %1005 = vmatprep.mubr.bf16.mxu0 0
          %1006 = vmatmul.mubr.bf16.gmra.mxu0 %v971
          %v1007 = vpop.f32.mrf.mxu0
          %v1008 = vadd.f32 %v877, %v1007
          %v1009 = vpop.f32.mrf.mxu0
          %v1010 = vpop.f32.mrf.mxu0
          %v1011 = vpop.f32.mrf.mxu0
          %1012 = vdwg.mxu0
          %v1014 = vsel %vm404, %v859, 0
          %1016 = vmatprep.subr.bf16.mxu0 0
          %1017 = vmatpush1.bf16.xpose.msra.mxu0 0
          %1018 = vmatprep.subr.bf16.mxu0 0
          %1019 = vmatpush1.bf16.xpose.msra.mxu0 0
          %1020 = vmatprep.subr.bf16.mxu0 0
          %1021 = vmatpush1.bf16.xpose.msra.mxu0 0
          %1022 = vmatprep.subr.bf16.mxu0 0
          %1023 = vmatpush1.bf16.xpose.msra.mxu0 0
          %1024 = vmatprep.subr.bf16.mxu0 0
          %1025 = vmatpush1.bf16.xpose.msra.mxu0 0
          %1026 = vmatprep.subr.bf16.mxu0 0
          %1027 = vmatpush1.bf16.xpose.msra.mxu0 0
          %1028 = vmatprep.subr.bf16.mxu0 0
          %1029 = vmatpush1.bf16.xpose.msra.mxu0 0
          %1030 = vmatprep.subr.bf16.mxu0 0
          %1031 = vmatpush1.bf16.xpose.msra.mxu0 %v406
          %1032 = vmatprep.subr.bf16.mxu0 0
          %1033 = vmatpush2.bf16.xpose.msra.mxu0 0
          %1034 = vmatprep.subr.bf16.mxu0 0
          %1035 = vmatpush2.bf16.xpose.msra.mxu0 0
          %1036 = vmatprep.subr.bf16.mxu0 0
          %1037 = vmatpush2.bf16.xpose.msra.mxu0 0
          %1038 = vmatprep.subr.bf16.mxu0 0
          %1039 = vmatpush2.bf16.xpose.msra.mxu0 0
          %1040 = vmatprep.subr.bf16.mxu0 0
          %1041 = vmatpush2.bf16.xpose.msra.mxu0 0
          %1042 = vmatprep.subr.bf16.mxu0 0
          %1043 = vmatpush2.bf16.xpose.msra.mxu0 0
          %1044 = vmatprep.subr.bf16.mxu0 0
          %1045 = vmatpush2.bf16.xpose.msra.mxu0 0
          %1046 = vmatprep.subr.bf16.mxu0 0
          %1047 = vmatpush2.bf16.xpose.msra.mxu0 0
          %1048 = vmatprep.mubr.bf16.mxu0 0
          %1049 = vmatmul.mubr.bf16.gmra.mxu0 %v1014
          %v1050 = vpop.f32.mrf.mxu0
          %v1051 = vadd.f32 %v882, %v1050
          %v1052 = vpop.f32.mrf.mxu0
          %v1053 = vpop.f32.mrf.mxu0
          %v1054 = vpop.f32.mrf.mxu0
          %1055 = vdwg.mxu0
          %v1056 = vpack.c.bf16 %v443, %v443
          %v1057 = vpack.c.bf16 %v495, %v495
          %v1058 = vpack.c.bf16 %v547, %v547
          %v1059 = vpack.c.bf16 %v599, %v599
          %vm1060 = vcmask 60416
          %1061 = vst.msk [vmem:[#allocation2] sm:$0xf] %vm1060, %v1056
          %1062 = vst.msk [vmem:[#allocation2 + $0x4] sm:$0xf] %vm1060, %v1057
          %1063 = vst.msk [vmem:[#allocation2 + $0x8] sm:$0xf] %vm1060, %v1058
          %1064 = vst.msk [vmem:[#allocation2 + $0xc] sm:$0xf] %vm1060, %v1059
          %v1065 = vpack.c.bf16 %v695, %v695
          %v1066 = vpack.c.bf16 %v747, %v747
          %v1067 = vpack.c.bf16 %v799, %v799
          %v1068 = vpack.c.bf16 %v851, %v851
          %1069 = vst.msk [vmem:[#allocation4] sm:$0xf] %vm1060, %v1065
          %1070 = vst.msk [vmem:[#allocation4 + $0x4] sm:$0xf] %vm1060, %v1066
          %1071 = vst.msk [vmem:[#allocation4 + $0x8] sm:$0xf] %vm1060, %v1067
          %1072 = vst.msk [vmem:[#allocation4 + $0xc] sm:$0xf] %vm1060, %v1068
          %v1073 = vpack.c.bf16 %v922, %v922
          %v1074 = vpack.c.bf16 %v965, %v965
          %v1075 = vpack.c.bf16 %v1008, %v1008
          %v1076 = vpack.c.bf16 %v1051, %v1051
          %1077 = vst.msk [vmem:[#allocation3] sm:$0xf] %vm1060, %v1073
          %1078 = vst.msk [vmem:[#allocation3 + $0x4] sm:$0xf] %vm1060, %v1074
          %1079 = vst.msk [vmem:[#allocation3 + $0x8] sm:$0xf] %vm1060, %v1075
          %1080 = vst.msk [vmem:[#allocation3 + $0xc] sm:$0xf] %vm1060, %v1076
        $region60: #{tpu_custom_call.1} parent=55 // pred_fallthru
          _
        %s1081 = smul.u32 %s28, 8
        %s1082 = sshra.s32 %s1081, 3
        %s1083 = sand.u32 %s1081, 7
        %s1084 = smul.addr %s1082, 4
        %s1085 = scalar_lea.vmem [#allocation2], %s1084
        %v1086 = vld [vmem:[%s1085] sm:$0xf]
        %v1087 = vld [vmem:[%s1085 + $0x4] sm:$0xf]
        %v1088 = vld [vmem:[%s1085 + $0x8] sm:$0xf]
        %v1089 = vld [vmem:[%s1085 + $0xc] sm:$0xf]
        %v1090 = vld [vmem:[#allocation3] sm:$0xf]
        %v1091 = vld [vmem:[#allocation3 + $0x4] sm:$0xf]
        %v1092 = vld [vmem:[#allocation3 + $0x8] sm:$0xf]
        %v1093 = vld [vmem:[#allocation3 + $0xc] sm:$0xf]
        %v1094 = vld [vmem:[#allocation4] sm:$0xf]
        %v1095 = vld [vmem:[#allocation4 + $0x4] sm:$0xf]
        %v1096 = vld [vmem:[#allocation4 + $0x8] sm:$0xf]
        %v1097 = vld [vmem:[#allocation4 + $0xc] sm:$0xf]
        %vm1098 = vcmask 64512
        %v1100 = vsel %vm1098, %v1086, 0
        %vm1102 = vcmask 1043456
        %v1104 = vsel %vm1102, %v1090, 0
        %1106 = vmatprep.subr.bf16.mxu0 0
        %1107 = vmatpush1.bf16.msra.mxu0 0
        %1108 = vmatprep.subr.bf16.mxu0 0
        %1109 = vmatpush1.bf16.msra.mxu0 0
        %1110 = vmatprep.subr.bf16.mxu0 0
        %1111 = vmatpush1.bf16.msra.mxu0 0
        %1112 = vmatprep.subr.bf16.mxu0 0
        %1113 = vmatpush1.bf16.msra.mxu0 0
        %1114 = vmatprep.subr.bf16.mxu0 0
        %1115 = vmatpush1.bf16.msra.mxu0 0
        %1116 = vmatprep.subr.bf16.mxu0 0
        %1117 = vmatpush1.bf16.msra.mxu0 0
        %1118 = vmatprep.subr.bf16.mxu0 0
        %1119 = vmatpush1.bf16.msra.mxu0 0
        %1120 = vmatprep.subr.bf16.mxu0 0
        %1121 = vmatpush1.bf16.msra.mxu0 %v1104
        %1122 = vmatprep.subr.bf16.mxu0 0
        %1123 = vmatpush2.bf16.msra.mxu0 0
        %1124 = vmatprep.subr.bf16.mxu0 0
        %1125 = vmatpush2.bf16.msra.mxu0 0
        %1126 = vmatprep.subr.bf16.mxu0 0
        %1127 = vmatpush2.bf16.msra.mxu0 0
        %1128 = vmatprep.subr.bf16.mxu0 0
        %1129 = vmatpush2.bf16.msra.mxu0 0
        %1130 = vmatprep.subr.bf16.mxu0 0
        %1131 = vmatpush2.bf16.msra.mxu0 0
        %1132 = vmatprep.subr.bf16.mxu0 0
        %1133 = vmatpush2.bf16.msra.mxu0 0
        %1134 = vmatprep.subr.bf16.mxu0 0
        %1135 = vmatpush2.bf16.msra.mxu0 0
        %1136 = vmatprep.subr.bf16.mxu0 0
        %1137 = vmatpush2.bf16.msra.mxu0 0
        %1138 = vmatprep.mubr.bf16.mxu0 0
        %1139 = vmatmul.mubr.bf16.gmra.mxu0 %v1100
        %v1140 = vpop.f32.mrf.mxu0
        %v1141 = vadd.f32 0.0, %v1140
        %v1142 = vpop.f32.mrf.mxu0
        %v1143 = vpop.f32.mrf.mxu0
        %v1144 = vpop.f32.mrf.mxu0
        %1145 = vdwg.mxu0
        %v1147 = vsel %vm1098, %v1087, 0
        %v1150 = vsel %vm1102, %v1091, 0
        %1152 = vmatprep.subr.bf16.mxu0 0
        %1153 = vmatpush1.bf16.msra.mxu0 0
        %1154 = vmatprep.subr.bf16.mxu0 0
        %1155 = vmatpush1.bf16.msra.mxu0 0
        %1156 = vmatprep.subr.bf16.mxu0 0
        %1157 = vmatpush1.bf16.msra.mxu0 0
        %1158 = vmatprep.subr.bf16.mxu0 0
        %1159 = vmatpush1.bf16.msra.mxu0 0
        %1160 = vmatprep.subr.bf16.mxu0 0
        %1161 = vmatpush1.bf16.msra.mxu0 0
        %1162 = vmatprep.subr.bf16.mxu0 0
        %1163 = vmatpush1.bf16.msra.mxu0 0
        %1164 = vmatprep.subr.bf16.mxu0 0
        %1165 = vmatpush1.bf16.msra.mxu0 0
        %1166 = vmatprep.subr.bf16.mxu0 0
        %1167 = vmatpush1.bf16.msra.mxu0 %v1150
        %1168 = vmatprep.subr.bf16.mxu0 0
        %1169 = vmatpush2.bf16.msra.mxu0 0
        %1170 = vmatprep.subr.bf16.mxu0 0
        %1171 = vmatpush2.bf16.msra.mxu0 0
        %1172 = vmatprep.subr.bf16.mxu0 0
        %1173 = vmatpush2.bf16.msra.mxu0 0
        %1174 = vmatprep.subr.bf16.mxu0 0
        %1175 = vmatpush2.bf16.msra.mxu0 0
        %1176 = vmatprep.subr.bf16.mxu0 0
        %1177 = vmatpush2.bf16.msra.mxu0 0
        %1178 = vmatprep.subr.bf16.mxu0 0
        %1179 = vmatpush2.bf16.msra.mxu0 0
        %1180 = vmatprep.subr.bf16.mxu0 0
        %1181 = vmatpush2.bf16.msra.mxu0 0
        %1182 = vmatprep.subr.bf16.mxu0 0
        %1183 = vmatpush2.bf16.msra.mxu0 0
        %1184 = vmatprep.mubr.bf16.mxu0 0
        %1185 = vmatmul.mubr.bf16.gmra.mxu0 %v1147
        %v1186 = vpop.f32.mrf.mxu0
        %v1187 = vadd.f32 0.0, %v1186
        %v1188 = vpop.f32.mrf.mxu0
        %v1189 = vpop.f32.mrf.mxu0
        %v1190 = vpop.f32.mrf.mxu0
        %1191 = vdwg.mxu0
        %v1193 = vsel %vm1098, %v1088, 0
        %v1196 = vsel %vm1102, %v1092, 0
        %1198 = vmatprep.subr.bf16.mxu0 0
        %1199 = vmatpush1.bf16.msra.mxu0 0
        %1200 = vmatprep.subr.bf16.mxu0 0
        %1201 = vmatpush1.bf16.msra.mxu0 0
        %1202 = vmatprep.subr.bf16.mxu0 0
        %1203 = vmatpush1.bf16.msra.mxu0 0
        %1204 = vmatprep.subr.bf16.mxu0 0
        %1205 = vmatpush1.bf16.msra.mxu0 0
        %1206 = vmatprep.subr.bf16.mxu0 0
        %1207 = vmatpush1.bf16.msra.mxu0 0
        %1208 = vmatprep.subr.bf16.mxu0 0
        %1209 = vmatpush1.bf16.msra.mxu0 0
        %1210 = vmatprep.subr.bf16.mxu0 0
        %1211 = vmatpush1.bf16.msra.mxu0 0
        %1212 = vmatprep.subr.bf16.mxu0 0
        %1213 = vmatpush1.bf16.msra.mxu0 %v1196
        %1214 = vmatprep.subr.bf16.mxu0 0
        %1215 = vmatpush2.bf16.msra.mxu0 0
        %1216 = vmatprep.subr.bf16.mxu0 0
        %1217 = vmatpush2.bf16.msra.mxu0 0
        %1218 = vmatprep.subr.bf16.mxu0 0
        %1219 = vmatpush2.bf16.msra.mxu0 0
        %1220 = vmatprep.subr.bf16.mxu0 0
        %1221 = vmatpush2.bf16.msra.mxu0 0
        %1222 = vmatprep.subr.bf16.mxu0 0
        %1223 = vmatpush2.bf16.msra.mxu0 0
        %1224 = vmatprep.subr.bf16.mxu0 0
        %1225 = vmatpush2.bf16.msra.mxu0 0
        %1226 = vmatprep.subr.bf16.mxu0 0
        %1227 = vmatpush2.bf16.msra.mxu0 0
        %1228 = vmatprep.subr.bf16.mxu0 0
        %1229 = vmatpush2.bf16.msra.mxu0 0
        %1230 = vmatprep.mubr.bf16.mxu0 0
        %1231 = vmatmul.mubr.bf16.gmra.mxu0 %v1193
        %v1232 = vpop.f32.mrf.mxu0
        %v1233 = vadd.f32 0.0, %v1232
        %v1234 = vpop.f32.mrf.mxu0
        %v1235 = vpop.f32.mrf.mxu0
        %v1236 = vpop.f32.mrf.mxu0
        %1237 = vdwg.mxu0
        %v1239 = vsel %vm1098, %v1089, 0
        %v1242 = vsel %vm1102, %v1093, 0
        %1244 = vmatprep.subr.bf16.mxu0 0
        %1245 = vmatpush1.bf16.msra.mxu0 0
        %1246 = vmatprep.subr.bf16.mxu0 0
        %1247 = vmatpush1.bf16.msra.mxu0 0
        %1248 = vmatprep.subr.bf16.mxu0 0
        %1249 = vmatpush1.bf16.msra.mxu0 0
        %1250 = vmatprep.subr.bf16.mxu0 0
        %1251 = vmatpush1.bf16.msra.mxu0 0
        %1252 = vmatprep.subr.bf16.mxu0 0
        %1253 = vmatpush1.bf16.msra.mxu0 0
        %1254 = vmatprep.subr.bf16.mxu0 0
        %1255 = vmatpush1.bf16.msra.mxu0 0
        %1256 = vmatprep.subr.bf16.mxu0 0
        %1257 = vmatpush1.bf16.msra.mxu0 0
        %1258 = vmatprep.subr.bf16.mxu0 0
        %1259 = vmatpush1.bf16.msra.mxu0 %v1242
        %1260 = vmatprep.subr.bf16.mxu0 0
        %1261 = vmatpush2.bf16.msra.mxu0 0
        %1262 = vmatprep.subr.bf16.mxu0 0
        %1263 = vmatpush2.bf16.msra.mxu0 0
        %1264 = vmatprep.subr.bf16.mxu0 0
        %1265 = vmatpush2.bf16.msra.mxu0 0
        %1266 = vmatprep.subr.bf16.mxu0 0
        %1267 = vmatpush2.bf16.msra.mxu0 0
        %1268 = vmatprep.subr.bf16.mxu0 0
        %1269 = vmatpush2.bf16.msra.mxu0 0
        %1270 = vmatprep.subr.bf16.mxu0 0
        %1271 = vmatpush2.bf16.msra.mxu0 0
        %1272 = vmatprep.subr.bf16.mxu0 0
        %1273 = vmatpush2.bf16.msra.mxu0 0
        %1274 = vmatprep.subr.bf16.mxu0 0
        %1275 = vmatpush2.bf16.msra.mxu0 0
        %1276 = vmatprep.mubr.bf16.mxu0 0
        %1277 = vmatmul.mubr.bf16.gmra.mxu0 %v1239
        %v1278 = vpop.f32.mrf.mxu0
        %v1279 = vadd.f32 0.0, %v1278
        %v1280 = vpop.f32.mrf.mxu0
        %v1281 = vpop.f32.mrf.mxu0
        %v1282 = vpop.f32.mrf.mxu0
        %1283 = vdwg.mxu0
        %v1284 = vsel %vm1098, %v1141, -inf
        %1285 = vmax.xlane.f32.xlu0 %v1284
        %v1286 = vpop.xlane.xlu0 %1285
        %v1287 = vsel %vm1098, %v1187, -inf
        %1288 = vmax.xlane.f32.xlu0 %v1287
        %v1289 = vpop.xlane.xlu0 %1288
        %v1290 = vsel %vm1098, %v1233, -inf
        %1291 = vmax.xlane.f32.xlu0 %v1290
        %v1292 = vpop.xlane.xlu0 %1291
        %v1293 = vsel %vm1098, %v1279, -inf
        %1294 = vmax.xlane.f32.xlu0 %v1293
        %v1295 = vpop.xlane.xlu0 %1294
        %v1296 = vsub.f32 %v1141, %v1286
        %v1297 = vsub.f32 %v1187, %v1289
        %v1298 = vsub.f32 %v1233, %v1292
        %v1299 = vsub.f32 %v1279, %v1295
        %v1300 = vmul.f32 %v1296, 1.442695
        %v1301 = vpow.pop %v1300
        %v1302 = vmul.f32 %v1297, 1.442695
        %v1303 = vpow.pop %v1302
        %v1304 = vmul.f32 %v1298, 1.442695
        %v1305 = vpow.pop %v1304
        %v1306 = vmul.f32 %v1299, 1.442695
        %v1307 = vpow.pop %v1306
        %v1308 = vsel %vm1098, %v1301, 0.0
        %1309 = vadd.xlane.f32.xlu0 %v1308
        %v1310 = vpop.xlane.xlu0 %1309
        %v1311 = vsel %vm1098, %v1303, 0.0
        %1312 = vadd.xlane.f32.xlu0 %v1311
        %v1313 = vpop.xlane.xlu0 %1312
        %v1314 = vsel %vm1098, %v1305, 0.0
        %1315 = vadd.xlane.f32.xlu0 %v1314
        %v1316 = vpop.xlane.xlu0 %1315
        %v1317 = vsel %vm1098, %v1307, 0.0
        %1318 = vadd.xlane.f32.xlu0 %v1317
        %v1319 = vpop.xlane.xlu0 %1318
        %v1320 = vpack.c.bf16 %v1301, %v1301
        %v1321 = vpack.c.bf16 %v1303, %v1303
        %v1322 = vpack.c.bf16 %v1305, %v1305
        %v1323 = vpack.c.bf16 %v1307, %v1307
        %v1325 = vsel %vm1098, %v1320, 0
        %v1328 = vsel %vm1102, %v1094, 0
        %1330 = vmatprep.subr.bf16.mxu0 0
        %1331 = vmatpush1.bf16.msra.mxu0 0
        %1332 = vmatprep.subr.bf16.mxu0 0
        %1333 = vmatpush1.bf16.msra.mxu0 0
        %1334 = vmatprep.subr.bf16.mxu0 0
        %1335 = vmatpush1.bf16.msra.mxu0 0
        %1336 = vmatprep.subr.bf16.mxu0 0
        %1337 = vmatpush1.bf16.msra.mxu0 0
        %1338 = vmatprep.subr.bf16.mxu0 0
        %1339 = vmatpush1.bf16.msra.mxu0 0
        %1340 = vmatprep.subr.bf16.mxu0 0
        %1341 = vmatpush1.bf16.msra.mxu0 0
        %1342 = vmatprep.subr.bf16.mxu0 0
        %1343 = vmatpush1.bf16.msra.mxu0 0
        %1344 = vmatprep.subr.bf16.mxu0 0
        %1345 = vmatpush1.bf16.msra.mxu0 %v1328
        %1346 = vmatprep.subr.bf16.mxu0 0
        %1347 = vmatpush2.bf16.msra.mxu0 0
        %1348 = vmatprep.subr.bf16.mxu0 0
        %1349 = vmatpush2.bf16.msra.mxu0 0
        %1350 = vmatprep.subr.bf16.mxu0 0
        %1351 = vmatpush2.bf16.msra.mxu0 0
        %1352 = vmatprep.subr.bf16.mxu0 0
        %1353 = vmatpush2.bf16.msra.mxu0 0
        %1354 = vmatprep.subr.bf16.mxu0 0
        %1355 = vmatpush2.bf16.msra.mxu0 0
        %1356 = vmatprep.subr.bf16.mxu0 0
        %1357 = vmatpush2.bf16.msra.mxu0 0
        %1358 = vmatprep.subr.bf16.mxu0 0
        %1359 = vmatpush2.bf16.msra.mxu0 0
        %1360 = vmatprep.subr.bf16.mxu0 0
        %1361 = vmatpush2.bf16.msra.mxu0 0
        %1362 = vmatprep.mubr.bf16.mxu0 0
        %1363 = vmatmul.mubr.bf16.gmra.mxu0 %v1325
        %v1364 = vpop.f32.mrf.mxu0
        %v1365 = vadd.f32 0.0, %v1364
        %v1366 = vpop.f32.mrf.mxu0
        %v1367 = vpop.f32.mrf.mxu0
        %v1368 = vpop.f32.mrf.mxu0
        %1369 = vdwg.mxu0
        %v1371 = vsel %vm1098, %v1321, 0
        %v1374 = vsel %vm1102, %v1095, 0
        %1376 = vmatprep.subr.bf16.mxu0 0
        %1377 = vmatpush1.bf16.msra.mxu0 0
        %1378 = vmatprep.subr.bf16.mxu0 0
        %1379 = vmatpush1.bf16.msra.mxu0 0
        %1380 = vmatprep.subr.bf16.mxu0 0
        %1381 = vmatpush1.bf16.msra.mxu0 0
        %1382 = vmatprep.subr.bf16.mxu0 0
        %1383 = vmatpush1.bf16.msra.mxu0 0
        %1384 = vmatprep.subr.bf16.mxu0 0
        %1385 = vmatpush1.bf16.msra.mxu0 0
        %1386 = vmatprep.subr.bf16.mxu0 0
        %1387 = vmatpush1.bf16.msra.mxu0 0
        %1388 = vmatprep.subr.bf16.mxu0 0
        %1389 = vmatpush1.bf16.msra.mxu0 0
        %1390 = vmatprep.subr.bf16.mxu0 0
        %1391 = vmatpush1.bf16.msra.mxu0 %v1374
        %1392 = vmatprep.subr.bf16.mxu0 0
        %1393 = vmatpush2.bf16.msra.mxu0 0
        %1394 = vmatprep.subr.bf16.mxu0 0
        %1395 = vmatpush2.bf16.msra.mxu0 0
        %1396 = vmatprep.subr.bf16.mxu0 0
        %1397 = vmatpush2.bf16.msra.mxu0 0
        %1398 = vmatprep.subr.bf16.mxu0 0
        %1399 = vmatpush2.bf16.msra.mxu0 0
        %1400 = vmatprep.subr.bf16.mxu0 0
        %1401 = vmatpush2.bf16.msra.mxu0 0
        %1402 = vmatprep.subr.bf16.mxu0 0
        %1403 = vmatpush2.bf16.msra.mxu0 0
        %1404 = vmatprep.subr.bf16.mxu0 0
        %1405 = vmatpush2.bf16.msra.mxu0 0
        %1406 = vmatprep.subr.bf16.mxu0 0
        %1407 = vmatpush2.bf16.msra.mxu0 0
        %1408 = vmatprep.mubr.bf16.mxu0 0
        %1409 = vmatmul.mubr.bf16.gmra.mxu0 %v1371
        %v1410 = vpop.f32.mrf.mxu0
        %v1411 = vadd.f32 0.0, %v1410
        %v1412 = vpop.f32.mrf.mxu0
        %v1413 = vpop.f32.mrf.mxu0
        %v1414 = vpop.f32.mrf.mxu0
        %1415 = vdwg.mxu0
        %v1417 = vsel %vm1098, %v1322, 0
        %v1420 = vsel %vm1102, %v1096, 0
        %1422 = vmatprep.subr.bf16.mxu0 0
        %1423 = vmatpush1.bf16.msra.mxu0 0
        %1424 = vmatprep.subr.bf16.mxu0 0
        %1425 = vmatpush1.bf16.msra.mxu0 0
        %1426 = vmatprep.subr.bf16.mxu0 0
        %1427 = vmatpush1.bf16.msra.mxu0 0
        %1428 = vmatprep.subr.bf16.mxu0 0
        %1429 = vmatpush1.bf16.msra.mxu0 0
        %1430 = vmatprep.subr.bf16.mxu0 0
        %1431 = vmatpush1.bf16.msra.mxu0 0
        %1432 = vmatprep.subr.bf16.mxu0 0
        %1433 = vmatpush1.bf16.msra.mxu0 0
        %1434 = vmatprep.subr.bf16.mxu0 0
        %1435 = vmatpush1.bf16.msra.mxu0 0
        %1436 = vmatprep.subr.bf16.mxu0 0
        %1437 = vmatpush1.bf16.msra.mxu0 %v1420
        %1438 = vmatprep.subr.bf16.mxu0 0
        %1439 = vmatpush2.bf16.msra.mxu0 0
        %1440 = vmatprep.subr.bf16.mxu0 0
        %1441 = vmatpush2.bf16.msra.mxu0 0
        %1442 = vmatprep.subr.bf16.mxu0 0
        %1443 = vmatpush2.bf16.msra.mxu0 0
        %1444 = vmatprep.subr.bf16.mxu0 0
        %1445 = vmatpush2.bf16.msra.mxu0 0
        %1446 = vmatprep.subr.bf16.mxu0 0
        %1447 = vmatpush2.bf16.msra.mxu0 0
        %1448 = vmatprep.subr.bf16.mxu0 0
        %1449 = vmatpush2.bf16.msra.mxu0 0
        %1450 = vmatprep.subr.bf16.mxu0 0
        %1451 = vmatpush2.bf16.msra.mxu0 0
        %1452 = vmatprep.subr.bf16.mxu0 0
        %1453 = vmatpush2.bf16.msra.mxu0 0
        %1454 = vmatprep.mubr.bf16.mxu0 0
        %1455 = vmatmul.mubr.bf16.gmra.mxu0 %v1417
        %v1456 = vpop.f32.mrf.mxu0
        %v1457 = vadd.f32 0.0, %v1456
        %v1458 = vpop.f32.mrf.mxu0
        %v1459 = vpop.f32.mrf.mxu0
        %v1460 = vpop.f32.mrf.mxu0
        %1461 = vdwg.mxu0
        %v1463 = vsel %vm1098, %v1323, 0
        %v1466 = vsel %vm1102, %v1097, 0
        %1468 = vmatprep.subr.bf16.mxu0 0
        %1469 = vmatpush1.bf16.msra.mxu0 0
        %1470 = vmatprep.subr.bf16.mxu0 0
        %1471 = vmatpush1.bf16.msra.mxu0 0
        %1472 = vmatprep.subr.bf16.mxu0 0
        %1473 = vmatpush1.bf16.msra.mxu0 0
        %1474 = vmatprep.subr.bf16.mxu0 0
        %1475 = vmatpush1.bf16.msra.mxu0 0
        %1476 = vmatprep.subr.bf16.mxu0 0
        %1477 = vmatpush1.bf16.msra.mxu0 0
        %1478 = vmatprep.subr.bf16.mxu0 0
        %1479 = vmatpush1.bf16.msra.mxu0 0
        %1480 = vmatprep.subr.bf16.mxu0 0
        %1481 = vmatpush1.bf16.msra.mxu0 0
        %1482 = vmatprep.subr.bf16.mxu0 0
        %1483 = vmatpush1.bf16.msra.mxu0 %v1466
        %1484 = vmatprep.subr.bf16.mxu0 0
        %1485 = vmatpush2.bf16.msra.mxu0 0
        %1486 = vmatprep.subr.bf16.mxu0 0
        %1487 = vmatpush2.bf16.msra.mxu0 0
        %1488 = vmatprep.subr.bf16.mxu0 0
        %1489 = vmatpush2.bf16.msra.mxu0 0
        %1490 = vmatprep.subr.bf16.mxu0 0
        %1491 = vmatpush2.bf16.msra.mxu0 0
        %1492 = vmatprep.subr.bf16.mxu0 0
        %1493 = vmatpush2.bf16.msra.mxu0 0
        %1494 = vmatprep.subr.bf16.mxu0 0
        %1495 = vmatpush2.bf16.msra.mxu0 0
        %1496 = vmatprep.subr.bf16.mxu0 0
        %1497 = vmatpush2.bf16.msra.mxu0 0
        %1498 = vmatprep.subr.bf16.mxu0 0
        %1499 = vmatpush2.bf16.msra.mxu0 0
        %1500 = vmatprep.mubr.bf16.mxu0 0
        %1501 = vmatmul.mubr.bf16.gmra.mxu0 %v1463
        %v1502 = vpop.f32.mrf.mxu0
        %v1503 = vadd.f32 0.0, %v1502
        %v1504 = vpop.f32.mrf.mxu0
        %v1505 = vpop.f32.mrf.mxu0
        %v1506 = vpop.f32.mrf.mxu0
        %1507 = vdwg.mxu0
        %v1508 = vrcp.pop %v1310
        %v1509 = vrcp.pop %v1313
        %v1510 = vrcp.pop %v1316
        %v1511 = vrcp.pop %v1319
        %v1512 = vmul.f32 %v1365, %v1508
        %v1513 = vmul.f32 %v1411, %v1509
        %v1514 = vmul.f32 %v1457, %v1510
        %v1515 = vmul.f32 %v1503, %v1511
        %v1516 = vpack.c.bf16 %v1512, %v1512
        %v1517 = vpack.c.bf16 %v1513, %v1513
        %v1518 = vpack.c.bf16 %v1514, %v1514
        %v1519 = vpack.c.bf16 %v1515, %v1515
        %v1520 = vld [vmem:[%s7] sm:$0xf]
        %v1521 = vld [vmem:[%s7 + $0x4] sm:$0xf]
        %v1523 = vsel %vm1098, %v1517, 0
        %v1526 = vsel %vm1102, %v1521, 0
        %1528 = vmatprep.subr.bf16.mxu0 0
        %1529 = vmatpush1.bf16.msra.mxu0 0
        %1530 = vmatprep.subr.bf16.mxu0 0
        %1531 = vmatpush1.bf16.msra.mxu0 0
        %1532 = vmatprep.subr.bf16.mxu0 0
        %1533 = vmatpush1.bf16.msra.mxu0 0
        %1534 = vmatprep.subr.bf16.mxu0 0
        %1535 = vmatpush1.bf16.msra.mxu0 0
        %1536 = vmatprep.subr.bf16.mxu0 0
        %1537 = vmatpush1.bf16.msra.mxu0 0
        %1538 = vmatprep.subr.bf16.mxu0 0
        %1539 = vmatpush1.bf16.msra.mxu0 0
        %1540 = vmatprep.subr.bf16.mxu0 0
        %1541 = vmatpush1.bf16.msra.mxu0 0
        %1542 = vmatprep.subr.bf16.mxu0 0
        %1543 = vmatpush1.bf16.msra.mxu0 %v1526
        %1544 = vmatprep.subr.bf16.mxu0 0
        %1545 = vmatpush2.bf16.msra.mxu0 0
        %1546 = vmatprep.subr.bf16.mxu0 0
        %1547 = vmatpush2.bf16.msra.mxu0 0
        %1548 = vmatprep.subr.bf16.mxu0 0
        %1549 = vmatpush2.bf16.msra.mxu0 0
        %1550 = vmatprep.subr.bf16.mxu0 0
        %1551 = vmatpush2.bf16.msra.mxu0 0
        %1552 = vmatprep.subr.bf16.mxu0 0
        %1553 = vmatpush2.bf16.msra.mxu0 0
        %1554 = vmatprep.subr.bf16.mxu0 0
        %1555 = vmatpush2.bf16.msra.mxu0 0
        %1556 = vmatprep.subr.bf16.mxu0 0
        %1557 = vmatpush2.bf16.msra.mxu0 0
        %1558 = vmatprep.subr.bf16.mxu0 0
        %1559 = vmatpush2.bf16.msra.mxu0 0
        %1560 = vmatprep.mubr.bf16.mxu0 0
        %1561 = vmatmul.mubr.bf16.gmra.mxu0 %v1523
        %v1562 = vpop.f32.mrf.mxu0
        %v1563 = vadd.f32 0.0, %v1562
        %v1564 = vpop.f32.mrf.mxu0
        %v1565 = vpop.f32.mrf.mxu0
        %v1566 = vpop.f32.mrf.mxu0
        %1567 = vdwg.mxu0
        %v1569 = vsel %vm1098, %v1516, 0
        %v1572 = vsel %vm1102, %v1520, 0
        %1574 = vmatprep.subr.bf16.mxu0 0
        %1575 = vmatpush1.bf16.msra.mxu0 0
        %1576 = vmatprep.subr.bf16.mxu0 0
        %1577 = vmatpush1.bf16.msra.mxu0 0
        %1578 = vmatprep.subr.bf16.mxu0 0
        %1579 = vmatpush1.bf16.msra.mxu0 0
        %1580 = vmatprep.subr.bf16.mxu0 0
        %1581 = vmatpush1.bf16.msra.mxu0 0
        %1582 = vmatprep.subr.bf16.mxu0 0
        %1583 = vmatpush1.bf16.msra.mxu0 0
        %1584 = vmatprep.subr.bf16.mxu0 0
        %1585 = vmatpush1.bf16.msra.mxu0 0
        %1586 = vmatprep.subr.bf16.mxu0 0
        %1587 = vmatpush1.bf16.msra.mxu0 0
        %1588 = vmatprep.subr.bf16.mxu0 0
        %1589 = vmatpush1.bf16.msra.mxu0 %v1572
        %1590 = vmatprep.subr.bf16.mxu0 0
        %1591 = vmatpush2.bf16.msra.mxu0 0
        %1592 = vmatprep.subr.bf16.mxu0 0
        %1593 = vmatpush2.bf16.msra.mxu0 0
        %1594 = vmatprep.subr.bf16.mxu0 0
        %1595 = vmatpush2.bf16.msra.mxu0 0
        %1596 = vmatprep.subr.bf16.mxu0 0
        %1597 = vmatpush2.bf16.msra.mxu0 0
        %1598 = vmatprep.subr.bf16.mxu0 0
        %1599 = vmatpush2.bf16.msra.mxu0 0
        %1600 = vmatprep.subr.bf16.mxu0 0
        %1601 = vmatpush2.bf16.msra.mxu0 0
        %1602 = vmatprep.subr.bf16.mxu0 0
        %1603 = vmatpush2.bf16.msra.mxu0 0
        %1604 = vmatprep.subr.bf16.mxu0 0
        %1605 = vmatpush2.bf16.msra.mxu0 0
        %1606 = vmatprep.mubr.bf16.mxu0 0
        %1607 = vmatmul.mubr.bf16.gmra.mxu0 %v1569
        %v1608 = vpop.f32.mrf.mxu0
        %v1609 = vadd.f32 %v1563, %v1608
        %v1610 = vpop.f32.mrf.mxu0
        %v1611 = vpop.f32.mrf.mxu0
        %v1612 = vpop.f32.mrf.mxu0
        %1613 = vdwg.mxu0
        %v1614 = vld [vmem:[%s7 + $0x8] sm:$0xf]
        %v1616 = vsel %vm1098, %v1518, 0
        %v1619 = vsel %vm1102, %v1614, 0
        %1621 = vmatprep.subr.bf16.mxu0 0
        %1622 = vmatpush1.bf16.msra.mxu0 0
        %1623 = vmatprep.subr.bf16.mxu0 0
        %1624 = vmatpush1.bf16.msra.mxu0 0
        %1625 = vmatprep.subr.bf16.mxu0 0
        %1626 = vmatpush1.bf16.msra.mxu0 0
        %1627 = vmatprep.subr.bf16.mxu0 0
        %1628 = vmatpush1.bf16.msra.mxu0 0
        %1629 = vmatprep.subr.bf16.mxu0 0
        %1630 = vmatpush1.bf16.msra.mxu0 0
        %1631 = vmatprep.subr.bf16.mxu0 0
        %1632 = vmatpush1.bf16.msra.mxu0 0
        %1633 = vmatprep.subr.bf16.mxu0 0
        %1634 = vmatpush1.bf16.msra.mxu0 0
        %1635 = vmatprep.subr.bf16.mxu0 0
        %1636 = vmatpush1.bf16.msra.mxu0 %v1619
        %1637 = vmatprep.subr.bf16.mxu0 0
        %1638 = vmatpush2.bf16.msra.mxu0 0
        %1639 = vmatprep.subr.bf16.mxu0 0
        %1640 = vmatpush2.bf16.msra.mxu0 0
        %1641 = vmatprep.subr.bf16.mxu0 0
        %1642 = vmatpush2.bf16.msra.mxu0 0
        %1643 = vmatprep.subr.bf16.mxu0 0
        %1644 = vmatpush2.bf16.msra.mxu0 0
        %1645 = vmatprep.subr.bf16.mxu0 0
        %1646 = vmatpush2.bf16.msra.mxu0 0
        %1647 = vmatprep.subr.bf16.mxu0 0
        %1648 = vmatpush2.bf16.msra.mxu0 0
        %1649 = vmatprep.subr.bf16.mxu0 0
        %1650 = vmatpush2.bf16.msra.mxu0 0
        %1651 = vmatprep.subr.bf16.mxu0 0
        %1652 = vmatpush2.bf16.msra.mxu0 0
        %1653 = vmatprep.mubr.bf16.mxu0 0
        %1654 = vmatmul.mubr.bf16.gmra.mxu0 %v1616
        %v1655 = vpop.f32.mrf.mxu0
        %v1656 = vadd.f32 0.0, %v1655
        %v1657 = vpop.f32.mrf.mxu0
        %v1658 = vpop.f32.mrf.mxu0
        %v1659 = vpop.f32.mrf.mxu0
        %1660 = vdwg.mxu0
        %v1661 = vadd.f32 %v1609, %v1656
        %v1662 = vld [vmem:[%s7 + $0xc] sm:$0xf]
        %v1664 = vsel %vm1098, %v1519, 0
        %v1667 = vsel %vm1102, %v1662, 0
        %1669 = vmatprep.subr.bf16.mxu0 0
        %1670 = vmatpush1.bf16.msra.mxu0 0
        %1671 = vmatprep.subr.bf16.mxu0 0
        %1672 = vmatpush1.bf16.msra.mxu0 0
        %1673 = vmatprep.subr.bf16.mxu0 0
        %1674 = vmatpush1.bf16.msra.mxu0 0
        %1675 = vmatprep.subr.bf16.mxu0 0
        %1676 = vmatpush1.bf16.msra.mxu0 0
        %1677 = vmatprep.subr.bf16.mxu0 0
        %1678 = vmatpush1.bf16.msra.mxu0 0
        %1679 = vmatprep.subr.bf16.mxu0 0
        %1680 = vmatpush1.bf16.msra.mxu0 0
        %1681 = vmatprep.subr.bf16.mxu0 0
        %1682 = vmatpush1.bf16.msra.mxu0 0
        %1683 = vmatprep.subr.bf16.mxu0 0
        %1684 = vmatpush1.bf16.msra.mxu0 %v1667
        %1685 = vmatprep.subr.bf16.mxu0 0
        %1686 = vmatpush2.bf16.msra.mxu0 0
        %1687 = vmatprep.subr.bf16.mxu0 0
        %1688 = vmatpush2.bf16.msra.mxu0 0
        %1689 = vmatprep.subr.bf16.mxu0 0
        %1690 = vmatpush2.bf16.msra.mxu0 0
        %1691 = vmatprep.subr.bf16.mxu0 0
        %1692 = vmatpush2.bf16.msra.mxu0 0
        %1693 = vmatprep.subr.bf16.mxu0 0
        %1694 = vmatpush2.bf16.msra.mxu0 0
        %1695 = vmatprep.subr.bf16.mxu0 0
        %1696 = vmatpush2.bf16.msra.mxu0 0
        %1697 = vmatprep.subr.bf16.mxu0 0
        %1698 = vmatpush2.bf16.msra.mxu0 0
        %1699 = vmatprep.subr.bf16.mxu0 0
        %1700 = vmatpush2.bf16.msra.mxu0 0
        %1701 = vmatprep.mubr.bf16.mxu0 0
        %1702 = vmatmul.mubr.bf16.gmra.mxu0 %v1664
        %v1703 = vpop.f32.mrf.mxu0
        %v1704 = vadd.f32 0.0, %v1703
        %v1705 = vpop.f32.mrf.mxu0
        %v1706 = vpop.f32.mrf.mxu0
        %v1707 = vpop.f32.mrf.mxu0
        %1708 = vdwg.mxu0
        %v1709 = vadd.f32 %v1661, %v1704
        %v1710 = vld [vmem:[%s8] sm:$0x1]
        %v1712 = vlaneseq
        %v1713 = vshrl.u32 %v1712, 7
        %v1714 = vsub.s32 0, %v1713
        %v1715 = vrot.slane %v1710, %v1714
        %v1717 = vadd.f32 %v1709, %v1715
        %vm1718 = vcmask 261120
        %1719 = vst.msk [vmem:[%s337] sm:$0xff] %vm1718, %v1717
        %s1720 = sand.u32 %s239, 1
        %s1721 = scalar_lea.sflag [#allocation6], %s1720
        %s1722 = sand.u32 %s239, 1
        %s1723 = smul.addr %s1722, 8
        %s1724 = scalar_lea.vmem [#allocation5], %s1723
        // Predicated region
        $region61: #{tpu_custom_call.1} parent=55 // pred_check
          %p1725 = pneg %p249
        $region62: #{tpu_custom_call.1} parent=55 // pred_check_branch
          %1727 = sbr.rel (%p1725) target = $region64
        $region63: #{tpu_custom_call.1} parent=55 // pred_region
          %s1729 = ssub.s32 128, 128
          %1730 = vsyncadd %s1721, %s1729
          %s1731 = sadd.s32 %s28, %s27
          %s1732 = smul.addr %s1731, 128
          %s1733 = scalar_lea.hbm %s9, %s1732
          %s1735 = sshll.u32 %s1724, 4
          %s1736 = int_to_ptr.vmem [resolvable:$true] %s1735
          %1738 = dma.vmem_to_hbm [thread:$0]  %s1736, 128, %s1733, %s1721
        $region64: #{tpu_custom_call.1} parent=55 // pred_fallthru
          _
      $region56: #{tpu_custom_call.1} parent=5 // pred_fallthru
        _
      %p1739 = scmp.le.s32.totalorder 2, %s18
      // Predicated region
      $region65: #{tpu_custom_call.1} parent=5 // pred_check
        %p1740 = pneg %p1739
      $region66: #{tpu_custom_call.1} parent=5 // pred_check_branch
        %1742 = sbr.rel (%p1740) target = $region68
      $region67: #{tpu_custom_call.1} parent=5 // pred_region
        %s1743 = ssub.s32 %s18, 2
        // Predicated region
        $region69: #{tpu_custom_call.1} parent=67 // pred_check
          %p1744 = pneg %p255
        $region70: #{tpu_custom_call.1} parent=67 // pred_check_branch
          %1746 = sbr.rel (%p1744) target = $region72
        $region71: #{tpu_custom_call.1} parent=67 // pred_region
          %s1747 = sand.u32 %s240, 1
          %s1748 = scalar_lea.sflag [#allocation6], %s1747
          %s1749 = sand.u32 %s240, 1
          %s1750 = smul.addr %s1749, 8
          %s1751 = scalar_lea.vmem [#allocation5], %s1750
          %1752 = dma.done %s1748, 128
        $region72: #{tpu_custom_call.1} parent=67 // pred_fallthru
          _
      $region68: #{tpu_custom_call.1} parent=5 // pred_fallthru
        _
    $region6: #{tpu_custom_call.1} parent=1 // loop_footer
      %s22 = sadd.s32 1, %s18
    $region7: #{tpu_custom_call.1} parent=1 // loop_footer_branch
      %17 = sbr.rel target = $region3
    $region8: #{tpu_custom_call.1} parent=1 // loop_exit
      _
    %1753 = vsyncpa [#allocation6], 1
    %s1754 = scalar_lea.sflag [#allocation6], 1
    %1755 = vsyncpa %s1754, 1

</llo_original>
